<compile_context>
chip_gen: v6e
topology: v6e:2x2x1
jax: 0.10.0
libtpu: 0.0.40
codegen_flags: <defaults>
</compile_context>

<pallas_src>
import functools

import jax
import jax.numpy as jnp
from jax.experimental import pallas as pl
from jax.experimental.pallas import tpu as pltpu


def _round_up(v, m):
    return (v + m - 1) // m * m


def _sum11(a):
    # Reduce a 2-D tile to a (1, 1) array, staying entirely in vector land.
    return jnp.sum(jnp.sum(a, axis=1, keepdims=True), axis=0, keepdims=True)


def _center_loss_kernel(i_idx_ref, j_idx_ref,
                        xi_ref, xj_ref, centers_t_ref, csq_ref,
                        xsq_i_ref, xsq_j_ref, li_ref, lj_ref,
                        losses_ref, intra_dist_ref,
                        acc_intra, acc_inter,
                        *, c_pad):
    t = pl.program_id(0)
    i = i_idx_ref[t]                      # row-tile index of this step
    j = j_idx_ref[t]                      # col-tile index (j <= i, triangular)

    xi = xi_ref[...]                      # (TB, D) f32  rows of the i-tile
    li = li_ref[...]                      # (TB, 1) int32, -1 marks padded rows
    lj = lj_ref[...]                      # (1, TB) int32 (row layout, no .T)
    xsq_i = xsq_i_ref[...]                # (TB, 1) f32 precomputed ||x||^2
    xsq_j = xsq_j_ref[...]                # (1, TB) f32 precomputed ||x||^2
    tb = xi.shape[0]

    valid_i = li >= 0                     # (TB, 1) bool
    valid_j = lj >= 0                     # (1, TB) bool

    # ---- per-i-tile init + intra term (runs once per i-tile, at j == 0) ----
    @pl.when(j == 0)
    def _init_and_intra():
        acc_inter[...] = jnp.zeros_like(acc_inter)

        xc = jnp.dot(xi, centers_t_ref[...],
                     preferred_element_type=jnp.float32)        # (TB, c_pad)
        intra_dm = xsq_i + csq_ref[...] - 2.0 * xc              # (TB, c_pad)
        classes = jax.lax.broadcasted_iota(jnp.int32, (tb, c_pad), 1)
        intra_mask = (li == classes).astype(jnp.float32)        # padded rows/cols -> 0
        intra_dist = intra_dm * intra_mask
        intra_dist_ref[...] = intra_dist                        # lane-dense store

        # Each valid row has exactly one (possibly tiny / fp-negative) nonzero
        # entry at its label column; clip only that per-row value.  The
        # (num_classes - 1) * 1e-12 constant from the masked zeros is added in
        # the wrapper (global constant = batch * (C - 1) * 1e-12).
        d_row = jnp.sum(intra_dist, axis=1, keepdims=True)      # (TB, 1)
        row_term = jnp.where(valid_i, jnp.clip(d_row, 1e-12, 1e12), 0.0)
        acc_intra[...] = _sum11(row_term)

    # ---- inter term for tile (i, j) ----
    # dot_general contracting the last dims of both operands: no in-kernel
    # transpose of the (TB, D) j-tile.
    xx = jax.lax.dot_general(xi, xj_ref[...], (((1,), (1,)), ((), ())),
                             preferred_element_type=jnp.float32)  # (TB, TB)
    inter_dm = xsq_i + xsq_j - 2.0 * xx                            # (TB, TB)
    diff = (li != lj).astype(jnp.float32)
    val = jnp.clip(jnp.log(inter_dm * diff + 1.0), 1e-12, 1e12)
    val = jnp.where(jnp.logical_and(valid_i, valid_j), val, 0.0)   # drop padding
    # Off-diagonal tiles of the triangular schedule count twice (symmetry);
    # diagonal tiles once.  Only a sublane reduce per step (lane reduce is
    # deferred to finalize).
    factor = jnp.where(j < i, 2.0, 1.0)
    acc_inter[...] += factor * jnp.sum(val, axis=0, keepdims=True)  # (1, TB)

    # ---- finalize the per-i partial losses at the diagonal (last j) step ----
    @pl.when(j == i)
    def _finalize():
        inter_p = _sum11(acc_inter[...])        # single lane reduction per i-tile
        intra_p = acc_intra[...]
        row = jax.lax.broadcasted_iota(jnp.int32, (8, 128), 0)
        lane = jax.lax.broadcasted_iota(jnp.int32, (8, 128), 1)
        # One unmasked full (8,128) store: intra partial in [0,0], inter in [0,1].
        losses_ref[...] = (
            jnp.where(jnp.logical_and(row == 0, lane == 0), intra_p, 0.0)
            + jnp.where(jnp.logical_and(row == 0, lane == 1), inter_p, 0.0))


def standalone_center_loss(x, centers, labels, *, block_b=256):
    """x: (B, D), centers: (C, D), labels: (B,) int.

    Returns (intra_loss, inter_loss, intra_dist) matching the PyTorch module
    (intra_dist is the masked (B, C) matrix before clamping).
    """
    batch, feat = x.shape
    num_classes, _ = centers.shape

    # Lane-dense geometry: batch tile TB is a multiple of 128 (unmasked vld/vst
    # on the row-layout (1, TB) blocks), classes padded to a multiple of 128.
    # block_b=256 fills the v6e/v7x 256x256 MXU; 128 is the natural v5e tile.
    tb = _round_up(max(int(block_b), 1), 128)
    tb = min(tb, _round_up(batch, 128))
    b_pad = _round_up(batch, tb)
    c_pad = _round_up(num_classes, 128)
    nb = b_pad // tb

    x_f32 = x.astype(jnp.float32)
    x_pad = jnp.zeros((b_pad, feat), jnp.float32).at[:batch].set(x_f32)

    labels_col = jnp.full((b_pad, 1), -1, jnp.int32).at[:batch, 0].set(
        labels.astype(jnp.int32))
    labels_row = labels_col.reshape(1, b_pad)

    centers_pad = jnp.zeros((c_pad, feat), jnp.float32).at[:num_classes].set(
        centers.astype(jnp.float32))
    centers_t = centers_pad.T                                       # (D, c_pad)
    csq_row = jnp.sum(centers_pad * centers_pad, axis=1)[None, :]   # (1, c_pad)

    # Precomputed row squared-norms in both layouts (one-off XLA ops; removes
    # the per-step VPU reduce and XLU relayouts from the kernel).
    xsq_col = jnp.sum(x_pad * x_pad, axis=1, keepdims=True)         # (b_pad, 1)
    xsq_row = xsq_col.reshape(1, b_pad)                             # (1, b_pad)

    # Triangular (j <= i) schedule, all j of an i-tile consecutive, j == 0
    # first (init + intra), j == i last (finalize).
    i_list, j_list = [], []
    for bi in range(nb):
        for bj in range(bi + 1):
            i_list.append(bi)
            j_list.append(bj)
    i_idx = jnp.asarray(i_list, jnp.int32)
    j_idx = jnp.asarray(j_list, jnp.int32)
    n_steps = len(i_list)

    kernel = functools.partial(_center_loss_kernel, c_pad=c_pad)

    grid_spec = pltpu.PrefetchScalarGridSpec(
        num_scalar_prefetch=2,
        grid=(n_steps,),
        in_specs=[
            pl.BlockSpec((tb, feat), lambda t, ii, jj: (ii[t], 0)),   # x rows (i)
            pl.BlockSpec((tb, feat), lambda t, ii, jj: (jj[t], 0)),   # x rows (j)
            pl.BlockSpec((feat, c_pad), lambda t, ii, jj: (0, 0)),    # centers^T
            pl.BlockSpec((1, c_pad), lambda t, ii, jj: (0, 0)),       # ||c||^2
            pl.BlockSpec((tb, 1), lambda t, ii, jj: (ii[t], 0)),      # ||x||^2 col
            pl.BlockSpec((1, tb), lambda t, ii, jj: (0, jj[t])),      # ||x||^2 row
            pl.BlockSpec((tb, 1), lambda t, ii, jj: (ii[t], 0)),      # labels col
            pl.BlockSpec((1, tb), lambda t, ii, jj: (0, jj[t])),      # labels row
        ],
        out_specs=[
            pl.BlockSpec((8, 128), lambda t, ii, jj: (ii[t], 0)),     # per-i losses
            pl.BlockSpec((tb, c_pad), lambda t, ii, jj: (ii[t], 0)),  # intra_dist
        ],
        scratch_shapes=[pltpu.VMEM((1, 1), jnp.float32),              # intra partial
                        pltpu.VMEM((1, tb), jnp.float32)],            # inter partial
    )

    # VMEM budget from the actual tile footprint (x2 for double buffering),
    # capped at v7x's 64 MiB physical.
    per_step_bytes = 4 * (2 * tb * feat            # xi, xj tiles
                          + feat * c_pad + c_pad   # centers^T, ||c||^2
                          + 4 * tb                 # norms + labels (both layouts)
                          + 8 * 128                # packed per-i losses block
                          + tb * c_pad)            # intra_dist block
    vmem_limit = int(min(max(2 * per_step_bytes + (2 << 20), 32 << 20), 64 << 20))
    # TODO(synk): for very large c_pad on v7x, add pipeline_mode=pl.Buffered(1)
    # on the constant centers^T / ||c||^2 inputs to drop their second buffer.

    losses, intra_dist_pad = pl.pallas_call(
        kernel,
        grid_spec=grid_spec,
        out_shape=(jax.ShapeDtypeStruct((nb * 8, 128), jnp.float32),
                   jax.ShapeDtypeStruct((b_pad, c_pad), jnp.float32)),
        compiler_params=pltpu.CompilerParams(
            # Triangular 1-D schedule with resident per-i accumulators/output
            # blocks -> the single grid axis is a sequential loop.
            dimension_semantics=("arbitrary",),
            vmem_limit_bytes=vmem_limit,
        ),
    )(i_idx, j_idx, x_pad, x_pad, centers_t, csq_row,
      xsq_col, xsq_row, labels_col, labels_row)

    # Tiny wrapper-side reduction of the per-i partials (also the numerically
    # safer place to sum them), plus the constant contributed by the masked
    # zeros of the intra matrix under torch.clamp(min=1e-12).
    intra_sum = jnp.sum(losses[:, 0]) + float(batch) * (num_classes - 1) * 1e-12
    inter_sum = jnp.sum(losses[:, 1])
    intra_loss = intra_sum / batch
    inter_loss = inter_sum / batch
    intra_dist = intra_dist_pad[:batch, :num_classes]
    return intra_loss, inter_loss, intra_dist


def _reference(x, centers, labels):
    """Pure-JAX mirror of the PyTorch forward."""
    b = x.shape[0]
    c = centers.shape[0]
    x_sq = jnp.sum(x * x, axis=1, keepdims=True)
    c_sq = jnp.sum(centers * centers, axis=1, keepdims=True)
    intra_dm = x_sq + c_sq.T - 2.0 * x @ centers.T
    inter_dm = x_sq + x_sq.T - 2.0 * x @ x.T
    m_intra = (labels[:, None] == jnp.arange(c)[None, :]).astype(jnp.float32)
    intra_dist = intra_dm * m_intra
    intra = jnp.sum(jnp.clip(intra_dist, 1e-12, 1e12)) / b
    m_inter = (labels[:, None] != labels[None, :]).astype(jnp.float32)
    inter = jnp.sum(jnp.clip(jnp.log(inter_dm * m_inter + 1.0), 1e-12, 1e12)) / b
    return intra, inter, intra_dist


if __name__ == "__main__":
    key = jax.random.PRNGKey(0)
    # Three small configs: exact tile multiples, batch/class padding with a
    # 3-tile triangular schedule (diagonal-once / off-diagonal-doubled), and
    # the larger 256-wide tile path.
    configs = [
        (256, 64, 16, 128),
        (300, 32, 10, 128),
        (300, 32, 10, 256),
    ]
    for (B, D, C, bb) in configs:
        kx, kc, kl, key = jax.random.split(key, 4)
        x = jax.random.normal(kx, (B, D), dtype=jnp.float32)
        # Deterministic stand-in for nn.Parameter(torch.randn(C, D)).
        centers = jax.random.normal(kc, (C, D), dtype=jnp.float32)
        labels = jax.random.randint(kl, (B,), 0, C, dtype=jnp.int32)

        intra_loss, inter_loss, intra_dist = standalone_center_loss(
            x, centers, labels, block_b=bb)
        jax.block_until_ready((intra_loss, inter_loss, intra_dist))

        r_intra, r_inter, r_dist = _reference(x, centers, labels)
        assert jnp.allclose(intra_loss, r_intra, rtol=1e-4, atol=1e-4), (
            intra_loss, r_intra)
        assert jnp.allclose(inter_loss, r_inter, rtol=1e-4, atol=1e-4), (
            inter_loss, r_inter)
        assert jnp.allclose(intra_dist, r_dist, rtol=1e-4, atol=1e-4)

    print("KERNEL_OK")
</pallas_src>

<mosaic_0001>
module attributes {stable_mosaic.version = 11 : i64} {
  func.func @_center_loss_kernel(%arg0: i32, %arg1: memref<3xi32, #tpu.memory_space<smem>>, %arg2: memref<3xi32, #tpu.memory_space<smem>>, %arg3: memref<128x64xf32, #tpu.memory_space<vmem>>, %arg4: memref<128x64xf32, #tpu.memory_space<vmem>>, %arg5: memref<64x128xf32, #tpu.memory_space<vmem>>, %arg6: memref<1x128xf32, #tpu.memory_space<vmem>>, %arg7: memref<128x1xf32, #tpu.memory_space<vmem>>, %arg8: memref<1x128xf32, #tpu.memory_space<vmem>>, %arg9: memref<128x1xi32, #tpu.memory_space<vmem>>, %arg10: memref<1x128xi32, #tpu.memory_space<vmem>>, %arg11: memref<8x128xf32, #tpu.memory_space<vmem>>, %arg12: memref<128x128xf32, #tpu.memory_space<vmem>>, %arg13: memref<1x1xf32, #tpu.memory_space<vmem>>, %arg14: memref<1x128xf32, #tpu.memory_space<vmem>>) attributes {dimension_semantics = [#tpu.dimension_semantics<arbitrary>], iteration_bounds = array<i64: 3>, scalar_prefetch = 2 : i64, scratch_operands = 2 : i64, tpu.core_type = #tpu.core_type<tc>, window_params = [{transform_indices = @transform_0, window_bounds = array<i64: 128, 64>}, {transform_indices = @transform_1, window_bounds = array<i64: 128, 64>}, {pipeline_mode = #tpu.pipeline_mode<synchronous>, transform_indices = @transform_2, window_bounds = array<i64: 64, 128>}, {pipeline_mode = #tpu.pipeline_mode<synchronous>, transform_indices = @transform_3, window_bounds = array<i64: 1, 128>}, {transform_indices = @transform_4, window_bounds = array<i64: 128, 1>}, {transform_indices = @transform_5, window_bounds = array<i64: 1, 128>}, {transform_indices = @transform_6, window_bounds = array<i64: 128, 1>}, {transform_indices = @transform_7, window_bounds = array<i64: 1, 128>}, {transform_indices = @transform_8, window_bounds = array<i64: 8, 128>}, {transform_indices = @transform_9, window_bounds = array<i64: 128, 128>}]} {
    %0 = arith.index_cast %arg0 : i32 to index
    %1 = memref.load %arg1[%0] : memref<3xi32, #tpu.memory_space<smem>>
    %2 = arith.index_cast %arg0 : i32 to index
    %3 = memref.load %arg2[%2] : memref<3xi32, #tpu.memory_space<smem>>
    %c0 = arith.constant 0 : index
    %c0_0 = arith.constant 0 : index
    %4 = vector.load %arg3[%c0, %c0_0] : memref<128x64xf32, #tpu.memory_space<vmem>>, vector<128x64xf32>
    %c0_1 = arith.constant 0 : index
    %c0_2 = arith.constant 0 : index
    %5 = vector.load %arg9[%c0_1, %c0_2] : memref<128x1xi32, #tpu.memory_space<vmem>>, vector<128x1xi32>
    %c0_3 = arith.constant 0 : index
    %c0_4 = arith.constant 0 : index
    %6 = vector.load %arg10[%c0_3, %c0_4] : memref<1x128xi32, #tpu.memory_space<vmem>>, vector<1x128xi32>
    %c0_5 = arith.constant 0 : index
    %c0_6 = arith.constant 0 : index
    %7 = vector.load %arg7[%c0_5, %c0_6] : memref<128x1xf32, #tpu.memory_space<vmem>>, vector<128x1xf32>
    %c0_7 = arith.constant 0 : index
    %c0_8 = arith.constant 0 : index
    %8 = vector.load %arg8[%c0_7, %c0_8] : memref<1x128xf32, #tpu.memory_space<vmem>>, vector<1x128xf32>
    %c0_i32 = arith.constant 0 : i32
    %9 = vector.broadcast %c0_i32 : i32 to vector<128x1xi32>
    %10 = arith.cmpi sge, %5, %9 : vector<128x1xi32>
    %c0_i32_9 = arith.constant 0 : i32
    %11 = vector.broadcast %c0_i32_9 : i32 to vector<1x128xi32>
    %12 = arith.cmpi sge, %6, %11 : vector<1x128xi32>
    %c0_i32_10 = arith.constant 0 : i32
    %13 = arith.cmpi eq, %3, %c0_i32_10 : i32
    %14 = arith.extui %13 : i1 to i32
    %c0_i32_11 = arith.constant 0 : i32
    %15 = arith.cmpi ne, %14, %c0_i32_11 : i32
    scf.if %15 {
      %cst_27 = arith.constant 0.000000e+00 : f32
      %54 = vector.broadcast %cst_27 : f32 to vector<1x128xf32>
      %c0_28 = arith.constant 0 : index
      %c0_29 = arith.constant 0 : index
      %55 = vector.load %arg14[%c0_28, %c0_29] : memref<1x128xf32, #tpu.memory_space<vmem>>, vector<1x128xf32>
      tpu.vector_store %arg14[%c0_28, %c0_29], %54 {strides = array<i32>} : memref<1x128xf32, #tpu.memory_space<vmem>>, vector<1x128xf32>,
      %c0_30 = arith.constant 0 : index
      %c0_31 = arith.constant 0 : index
      %56 = vector.load %arg5[%c0_30, %c0_31] : memref<64x128xf32, #tpu.memory_space<vmem>>, vector<64x128xf32>
      %cst_32 = arith.constant dense<0.000000e+00> : vector<128x128xf32>
      %57 = tpu.matmul %4, %56, %cst_32 {dimension_numbers = #tpu.dot_dimension_numbers<[1], [0], [0], [1], [0, 0, 1, 1], [], []>} : vector<128x64xf32>, vector<64x128xf32>, vector<128x128xf32> -> vector<128x128xf32>
      %c0_33 = arith.constant 0 : index
      %c0_34 = arith.constant 0 : index
      %58 = vector.load %arg6[%c0_33, %c0_34] : memref<1x128xf32, #tpu.memory_space<vmem>>, vector<1x128xf32>
      %59 = vector.broadcast %7 : vector<128x1xf32> to vector<128x128xf32>
      %60 = vector.broadcast %58 : vector<1x128xf32> to vector<128x128xf32>
      %61 = arith.addf %59, %60 : vector<128x128xf32>
      %cst_35 = arith.constant 2.000000e+00 : f32
      %62 = vector.broadcast %cst_35 : f32 to vector<128x128xf32>
      %63 = arith.mulf %62, %57 : vector<128x128xf32>
      %64 = arith.subf %61, %63 : vector<128x128xf32>
      %65 = tpu.iota {dimensions = array<i32: 1>} : vector<128x128xi32>
      %66 = vector.broadcast %5 : vector<128x1xi32> to vector<128x128xi32>
      %67 = arith.cmpi eq, %66, %65 : vector<128x128xi32>
      %68 = arith.extui %67 : vector<128x128xi1> to vector<128x128xi32>
      %69 = arith.sitofp %68 : vector<128x128xi32> to vector<128x128xf32>
      %70 = arith.mulf %64, %69 : vector<128x128xf32>
      %c0_36 = arith.constant 0 : index
      %c0_37 = arith.constant 0 : index
      %71 = vector.load %arg12[%c0_36, %c0_37] : memref<128x128xf32, #tpu.memory_space<vmem>>, vector<128x128xf32>
      tpu.vector_store %arg12[%c0_36, %c0_37], %70 {strides = array<i32>} : memref<128x128xf32, #tpu.memory_space<vmem>>, vector<128x128xf32>,
      %cst_38 = arith.constant dense<0.000000e+00> : vector<128xf32>
      %72 = vector.multi_reduction <add>, %70, %cst_38 [1] : vector<128x128xf32> to vector<128xf32>
      %73 = vector.shape_cast %72 : vector<128xf32> to vector<128x1xf32>
      %cst_39 = arith.constant 9.99999996E-13 : f32
      %cst_40 = arith.constant 9.99999995E+11 : f32
      %74 = vector.broadcast %cst_39 : f32 to vector<128x1xf32>
      %75 = arith.maximumf %74, %73 : vector<128x1xf32>
      %76 = vector.broadcast %cst_40 : f32 to vector<128x1xf32>
      %77 = arith.minimumf %76, %75 : vector<128x1xf32>
      %cst_41 = arith.constant 0.000000e+00 : f32
      %78 = vector.broadcast %cst_41 : f32 to vector<128x1xf32>
      %79 = arith.select %10, %77, %78 : vector<128x1xi1>, vector<128x1xf32>
      %cst_42 = arith.constant dense<0.000000e+00> : vector<128xf32>
      %80 = vector.multi_reduction <add>, %79, %cst_42 [1] : vector<128x1xf32> to vector<128xf32>
      %81 = vector.shape_cast %80 : vector<128xf32> to vector<128x1xf32>
      %cst_43 = arith.constant dense<0.000000e+00> : vector<1xf32>
      %82 = vector.multi_reduction <add>, %81, %cst_43 [0] : vector<128x1xf32> to vector<1xf32>
      %83 = vector.shape_cast %82 : vector<1xf32> to vector<1x1xf32>
      %c0_44 = arith.constant 0 : index
      %c0_45 = arith.constant 0 : index
      %84 = vector.load %arg13[%c0_44, %c0_45] : memref<1x1xf32, #tpu.memory_space<vmem>>, vector<1x1xf32>
      tpu.vector_store %arg13[%c0_44, %c0_45], %83 {strides = array<i32>} : memref<1x1xf32, #tpu.memory_space<vmem>>, vector<1x1xf32>,
    } else {
    }
    %c0_12 = arith.constant 0 : index
    %c0_13 = arith.constant 0 : index
    %16 = vector.load %arg4[%c0_12, %c0_13] : memref<128x64xf32, #tpu.memory_space<vmem>>, vector<128x64xf32>
    %cst = arith.constant dense<0.000000e+00> : vector<128x128xf32>
    %17 = tpu.matmul %4, %16, %cst {dimension_numbers = #tpu.dot_dimension_numbers<[1], [1], [0], [0], [0, 0, 1, 0], [], []>} : vector<128x64xf32>, vector<128x64xf32>, vector<128x128xf32> -> vector<128x128xf32>
    %18 = vector.broadcast %7 : vector<128x1xf32> to vector<128x128xf32>
    %19 = vector.broadcast %8 : vector<1x128xf32> to vector<128x128xf32>
    %20 = arith.addf %18, %19 : vector<128x128xf32>
    %cst_14 = arith.constant 2.000000e+00 : f32
    %21 = vector.broadcast %cst_14 : f32 to vector<128x128xf32>
    %22 = arith.mulf %21, %17 : vector<128x128xf32>
    %23 = arith.subf %20, %22 : vector<128x128xf32>
    %24 = vector.broadcast %5 : vector<128x1xi32> to vector<128x128xi32>
    %25 = vector.broadcast %6 : vector<1x128xi32> to vector<128x128xi32>
    %26 = arith.cmpi ne, %24, %25 : vector<128x128xi32>
    %27 = arith.extui %26 : vector<128x128xi1> to vector<128x128xi32>
    %28 = arith.sitofp %27 : vector<128x128xi32> to vector<128x128xf32>
    %29 = arith.mulf %23, %28 : vector<128x128xf32>
    %cst_15 = arith.constant 1.000000e+00 : f32
    %30 = vector.broadcast %cst_15 : f32 to vector<128x128xf32>
    %31 = arith.addf %29, %30 : vector<128x128xf32>
    %32 = math.log %31 : vector<128x128xf32>
    %cst_16 = arith.constant 9.99999996E-13 : f32
    %cst_17 = arith.constant 9.99999995E+11 : f32
    %33 = vector.broadcast %cst_16 : f32 to vector<128x128xf32>
    %34 = arith.maximumf %33, %32 : vector<128x128xf32>
    %35 = vector.broadcast %cst_17 : f32 to vector<128x128xf32>
    %36 = arith.minimumf %35, %34 : vector<128x128xf32>
    %37 = vector.broadcast %10 : vector<128x1xi1> to vector<128x128xi1>
    %38 = vector.broadcast %12 : vector<1x128xi1> to vector<128x128xi1>
    %39 = arith.andi %37, %38 : vector<128x128xi1>
    %cst_18 = arith.constant 0.000000e+00 : f32
    %40 = vector.broadcast %cst_18 : f32 to vector<128x128xf32>
    %41 = arith.select %39, %36, %40 : vector<128x128xi1>, vector<128x128xf32>
    %42 = arith.cmpi slt, %3, %1 : i32
    %cst_19 = arith.constant 2.000000e+00 : f32
    %cst_20 = arith.constant 1.000000e+00 : f32
    %43 = arith.select %42, %cst_19, %cst_20 : f32
    %c0_21 = arith.constant 0 : index
    %c0_22 = arith.constant 0 : index
    %44 = vector.load %arg14[%c0_21, %c0_22] : memref<1x128xf32, #tpu.memory_space<vmem>>, vector<1x128xf32>
    %cst_23 = arith.constant dense<0.000000e+00> : vector<128xf32>
    %45 = vector.multi_reduction <add>, %41, %cst_23 [0] : vector<128x128xf32> to vector<128xf32>
    %46 = vector.shape_cast %45 : vector<128xf32> to vector<1x128xf32>
    %47 = vector.broadcast %43 : f32 to vector<1x128xf32>
    %48 = arith.mulf %47, %46 : vector<1x128xf32>
    %49 = arith.addf %44, %48 : vector<1x128xf32>
    %c0_24 = arith.constant 0 : index
    %c0_25 = arith.constant 0 : index
    %50 = vector.load %arg14[%c0_24, %c0_25] : memref<1x128xf32, #tpu.memory_space<vmem>>, vector<1x128xf32>
    tpu.vector_store %arg14[%c0_24, %c0_25], %49 {strides = array<i32>} : memref<1x128xf32, #tpu.memory_space<vmem>>, vector<1x128xf32>,
    %51 = arith.cmpi eq, %3, %1 : i32
    %52 = arith.extui %51 : i1 to i32
    %c0_i32_26 = arith.constant 0 : i32
    %53 = arith.cmpi ne, %52, %c0_i32_26 : i32
    scf.if %53 {
      %c0_27 = arith.constant 0 : index
      %c0_28 = arith.constant 0 : index
      %54 = vector.load %arg14[%c0_27, %c0_28] : memref<1x128xf32, #tpu.memory_space<vmem>>, vector<1x128xf32>
      %cst_29 = arith.constant dense<0.000000e+00> : vector<1xf32>
      %55 = vector.multi_reduction <add>, %54, %cst_29 [1] : vector<1x128xf32> to vector<1xf32>
      %56 = vector.shape_cast %55 : vector<1xf32> to vector<1x1xf32>
      %cst_30 = arith.constant dense<0.000000e+00> : vector<1xf32>
      %57 = vector.multi_reduction <add>, %56, %cst_30 [0] : vector<1x1xf32> to vector<1xf32>
      %58 = vector.shape_cast %57 : vector<1xf32> to vector<1x1xf32>
      %c0_31 = arith.constant 0 : index
      %c0_32 = arith.constant 0 : index
      %59 = vector.load %arg13[%c0_31, %c0_32] : memref<1x1xf32, #tpu.memory_space<vmem>>, vector<1x1xf32>
      %60 = tpu.iota {dimensions = array<i32: 0>} : vector<8x128xi32>
      %61 = tpu.iota {dimensions = array<i32: 1>} : vector<8x128xi32>
      %c0_i32_33 = arith.constant 0 : i32
      %62 = vector.broadcast %c0_i32_33 : i32 to vector<8x128xi32>
      %63 = arith.cmpi eq, %60, %62 : vector<8x128xi32>
      %c0_i32_34 = arith.constant 0 : i32
      %64 = vector.broadcast %c0_i32_34 : i32 to vector<8x128xi32>
      %65 = arith.cmpi eq, %61, %64 : vector<8x128xi32>
      %66 = arith.andi %63, %65 : vector<8x128xi1>
      %cst_35 = arith.constant 0.000000e+00 : f32
      %67 = vector.shape_cast %59 : vector<1x1xf32> to vector<1x1xf32>
      %68 = vector.broadcast %67 : vector<1x1xf32> to vector<8x128xf32>
      %69 = vector.broadcast %cst_35 : f32 to vector<8x128xf32>
      %70 = arith.select %66, %68, %69 : vector<8x128xi1>, vector<8x128xf32>
      %c0_i32_36 = arith.constant 0 : i32
      %71 = vector.broadcast %c0_i32_36 : i32 to vector<8x128xi32>
      %72 = arith.cmpi eq, %60, %71 : vector<8x128xi32>
      %c1_i32 = arith.constant 1 : i32
      %73 = vector.broadcast %c1_i32 : i32 to vector<8x128xi32>
      %74 = arith.cmpi eq, %61, %73 : vector<8x128xi32>
      %75 = arith.andi %72, %74 : vector<8x128xi1>
      %cst_37 = arith.constant 0.000000e+00 : f32
      %76 = vector.shape_cast %58 : vector<1x1xf32> to vector<1x1xf32>
      %77 = vector.broadcast %76 : vector<1x1xf32> to vector<8x128xf32>
      %78 = vector.broadcast %cst_37 : f32 to vector<8x128xf32>
      %79 = arith.select %75, %77, %78 : vector<8x128xi1>, vector<8x128xf32>
      %80 = arith.addf %70, %79 : vector<8x128xf32>
      %c0_38 = arith.constant 0 : index
      %c0_39 = arith.constant 0 : index
      %81 = vector.load %arg11[%c0_38, %c0_39] : memref<8x128xf32, #tpu.memory_space<vmem>>, vector<8x128xf32>
      tpu.vector_store %arg11[%c0_38, %c0_39], %80 {strides = array<i32>} : memref<8x128xf32, #tpu.memory_space<vmem>>, vector<8x128xf32>,
    } else {
    }
    return
  }
  func.func @transform_0(%arg0: i32, %arg1: memref<3xi32, #tpu.memory_space<smem>>, %arg2: memref<3xi32, #tpu.memory_space<smem>>) -> (i32, i32) {
    %0 = arith.index_cast %arg0 : i32 to index
    %1 = memref.load %arg1[%0] : memref<3xi32, #tpu.memory_space<smem>>
    %c0_i32 = arith.constant 0 : i32
    %c0_i32_0 = arith.constant 0 : i32
    return %1, %c0_i32 : i32, i32
  }
  func.func @transform_1(%arg0: i32, %arg1: memref<3xi32, #tpu.memory_space<smem>>, %arg2: memref<3xi32, #tpu.memory_space<smem>>) -> (i32, i32) {
    %0 = arith.index_cast %arg0 : i32 to index
    %1 = memref.load %arg2[%0] : memref<3xi32, #tpu.memory_space<smem>>
    %c0_i32 = arith.constant 0 : i32
    %c0_i32_0 = arith.constant 0 : i32
    return %1, %c0_i32 : i32, i32
  }
  func.func @transform_2(%arg0: i32, %arg1: memref<3xi32, #tpu.memory_space<smem>>, %arg2: memref<3xi32, #tpu.memory_space<smem>>) -> (i32, i32) {
    %c0_i32 = arith.constant 0 : i32
    %c0_i32_0 = arith.constant 0 : i32
    %c0_i32_1 = arith.constant 0 : i32
    return %c0_i32, %c0_i32_0 : i32, i32
  }
  func.func @transform_3(%arg0: i32, %arg1: memref<3xi32, #tpu.memory_space<smem>>, %arg2: memref<3xi32, #tpu.memory_space<smem>>) -> (i32, i32) {
    %c0_i32 = arith.constant 0 : i32
    %c0_i32_0 = arith.constant 0 : i32
    %c0_i32_1 = arith.constant 0 : i32
    return %c0_i32, %c0_i32_0 : i32, i32
  }
  func.func @transform_4(%arg0: i32, %arg1: memref<3xi32, #tpu.memory_space<smem>>, %arg2: memref<3xi32, #tpu.memory_space<smem>>) -> (i32, i32) {
    %0 = arith.index_cast %arg0 : i32 to index
    %1 = memref.load %arg1[%0] : memref<3xi32, #tpu.memory_space<smem>>
    %c0_i32 = arith.constant 0 : i32
    %c0_i32_0 = arith.constant 0 : i32
    return %1, %c0_i32 : i32, i32
  }
  func.func @transform_5(%arg0: i32, %arg1: memref<3xi32, #tpu.memory_space<smem>>, %arg2: memref<3xi32, #tpu.memory_space<smem>>) -> (i32, i32) {
    %0 = arith.index_cast %arg0 : i32 to index
    %1 = memref.load %arg2[%0] : memref<3xi32, #tpu.memory_space<smem>>
    %c0_i32 = arith.constant 0 : i32
    %c0_i32_0 = arith.constant 0 : i32
    return %c0_i32, %1 : i32, i32
  }
  func.func @transform_6(%arg0: i32, %arg1: memref<3xi32, #tpu.memory_space<smem>>, %arg2: memref<3xi32, #tpu.memory_space<smem>>) -> (i32, i32) {
    %0 = arith.index_cast %arg0 : i32 to index
    %1 = memref.load %arg1[%0] : memref<3xi32, #tpu.memory_space<smem>>
    %c0_i32 = arith.constant 0 : i32
    %c0_i32_0 = arith.constant 0 : i32
    return %1, %c0_i32 : i32, i32
  }
  func.func @transform_7(%arg0: i32, %arg1: memref<3xi32, #tpu.memory_space<smem>>, %arg2: memref<3xi32, #tpu.memory_space<smem>>) -> (i32, i32) {
    %0 = arith.index_cast %arg0 : i32 to index
    %1 = memref.load %arg2[%0] : memref<3xi32, #tpu.memory_space<smem>>
    %c0_i32 = arith.constant 0 : i32
    %c0_i32_0 = arith.constant 0 : i32
    return %c0_i32, %1 : i32, i32
  }
  func.func @transform_8(%arg0: i32, %arg1: memref<3xi32, #tpu.memory_space<smem>>, %arg2: memref<3xi32, #tpu.memory_space<smem>>) -> (i32, i32) {
    %0 = arith.index_cast %arg0 : i32 to index
    %1 = memref.load %arg1[%0] : memref<3xi32, #tpu.memory_space<smem>>
    %c0_i32 = arith.constant 0 : i32
    %c0_i32_0 = arith.constant 0 : i32
    return %1, %c0_i32 : i32, i32
  }
  func.func @transform_9(%arg0: i32, %arg1: memref<3xi32, #tpu.memory_space<smem>>, %arg2: memref<3xi32, #tpu.memory_space<smem>>) -> (i32, i32) {
    %0 = arith.index_cast %arg0 : i32 to index
    %1 = memref.load %arg1[%0] : memref<3xi32, #tpu.memory_space<smem>>
    %c0_i32 = arith.constant 0 : i32
    %c0_i32_0 = arith.constant 0 : i32
    return %1, %c0_i32 : i32, i32
  }
}

</mosaic_0001>

<llo_original>
// kernel: tpu_custom_call.1
$region0: #{tpu_custom_call.1}
  #allocation0 [shape = 'u32[]', space=smem, size = 0x4, offset = 0x4, fixed_abs, tag = 'smem constant byte address 0x4 - core index']
  #allocation1 [shape = 'u32[144,128]{1,0:T(1,128)}', space=vmem, size = 0x12000, scoped, tag = 'internal scratch']
  #allocation2 [shape = 'f32[1,1]{1,0:T(1,128)}', space=vmem, size = 0x200, scoped, tag = 'scratch operand']
  #allocation3 [shape = 'f32[1,128]{1,0:T(1,128)}', space=vmem, size = 0x200, scoped, tag = 'scratch operand']
  #allocation4 [shape = 's32[1]{0}', space=sflag, size = 0x4, scoped, tag = 'scoped memory for tpu_custom_call.1']
  #allocation5 [shape = 'u8[512]{0}', space=smem, size = 0x200, scoped, tag = 'prefetched SMEM operand 0']
  #allocation6 [shape = 'u8[512]{0}', space=smem, size = 0x200, scoped, tag = 'prefetched SMEM operand 1']
  %s0 = inlined_call_operand.vmem [shape: s32[3], index: 0, kind: input, shape index: {}]
  %s1 = inlined_call_operand.vmem [shape: s32[3], index: 1, kind: input, shape index: {}]
  %s2 = inlined_call_operand.vmem [shape: f32[256,64], index: 2, kind: input, shape index: {}]
  %s3 = inlined_call_operand.vmem [shape: f32[256,64], index: 3, kind: input, shape index: {}]
  %s4 = inlined_call_operand.vmem [shape: f32[64,128], index: 4, kind: input, shape index: {}]
  %s5 = inlined_call_operand.vmem [shape: f32[1,128], index: 5, kind: input, shape index: {}]
  %s6 = inlined_call_operand.vmem [shape: f32[256,1], index: 6, kind: input, shape index: {}]
  %s7 = inlined_call_operand.vmem [shape: f32[1,256], index: 7, kind: input, shape index: {}]
  %s8 = inlined_call_operand.vmem [shape: s32[256,1], index: 8, kind: input, shape index: {}]
  %s9 = inlined_call_operand.vmem [shape: s32[1,256], index: 9, kind: input, shape index: {}]
  %s10 = inlined_call_operand.hbm [shape: f32[16,128], index: 10, kind: output, shape index: {0}]
  %s11 = inlined_call_operand.hbm [shape: f32[256,128], index: 11, kind: output, shape index: {1}]
  %12 = xla_tuple %s10, %s11
  %s13 = sld [smem:[#allocation0]]
  $region81: #{tpu_custom_call.1} parent=0
    _
  %s15 = ssub.s32 1, %s13
  %s16 = scalar_select 0, %s15, %s13
  %s17 = sshll.u32 %s0, 4
  %s18 = int_to_ptr.vmem [resolvable:$true] %s17
  %20 = dma.vmem_to_smem %s18, 16, [#allocation5], [#allocation4]
  %s21 = sshll.u32 %s1, 4
  %s22 = int_to_ptr.vmem [resolvable:$true] %s21
  %24 = dma.vmem_to_smem %s22, 16, [#allocation6], [#allocation4]
  %25 = dma.done [#allocation4], 32
  %26 = sfence
  $region1: #{tpu_custom_call.1} parent=0
    #allocation7 [shape = 'u8[8192]{0}', space=vmem, size = 0x2000, scoped, tag = 'output window, operand 0']
    #allocation8 [shape = 's32[2]{0}', space=sflag, size = 0x8, scoped, tag = 'scoped memory for tpu_custom_call.1']
    #allocation9 [shape = 'u8[131072]{0}', space=vmem, size = 0x20000, scoped, tag = 'output window, operand 1']
    #allocation10 [shape = 's32[2]{0}', space=sflag, size = 0x8, scoped, tag = 'scoped memory for tpu_custom_call.1']
    %27 = vsyncpa [#allocation8], 0
    %s28 = scalar_lea.sflag [#allocation8], 1
    %29 = vsyncpa %s28, 0
    %30 = vsyncpa [#allocation10], 0
    %s31 = scalar_lea.sflag [#allocation10], 1
    %32 = vsyncpa %s31, 0
    loop: start=0, step=1, limit=5
    $region2: #{tpu_custom_call.1} parent=1 // loop_pre_header
      _
    $region3: #{tpu_custom_call.1} parent=1 // loop_header
      %s34 = sphi 0, %s38
      %p35 = scmp.ge.s32.totalorder %s34, 5
      %s46 = sphi 0, %s48
      %s49 = sphi 0, %s46
      %s50 = sphi 0, %s49
      %s66 = sphi 0, %s50
      %s74 = sphi 0, %s76
      %s77 = sphi 0, %s74
      %s78 = sphi 0, %s77
      %s94 = sphi 0, %s78
      %s98 = sphi 0, %s98
      %s100 = sphi 0, %s98
      %s101 = sphi 0, %s100
      %s115 = sphi 0, %s101
      %s119 = sphi 0, %s119
      %s121 = sphi 0, %s119
      %s122 = sphi 0, %s121
      %s136 = sphi 0, %s122
      %s144 = sphi 0, %s146
      %s147 = sphi 0, %s144
      %s148 = sphi 0, %s147
      %s164 = sphi 0, %s148
      %s172 = sphi 0, %s174
      %s175 = sphi 0, %s172
      %s176 = sphi 0, %s175
      %s192 = sphi 0, %s176
      %s200 = sphi 0, %s202
      %s203 = sphi 0, %s200
      %s204 = sphi 0, %s203
      %s220 = sphi 0, %s204
      %s228 = sphi 0, %s230
      %s231 = sphi 0, %s228
      %s232 = sphi 0, %s231
      %s248 = sphi 0, %s232
      %s256 = sphi 0, %s258
      %s259 = sphi 0, %s256
      %s260 = sphi 0, %s259
      %s276 = sphi 0, %s260
      %s284 = sphi 0, %s286
      %s287 = sphi 0, %s284
      %s288 = sphi 0, %s287
      %s304 = sphi 0, %s288
    $region4: #{tpu_custom_call.1} parent=1 // loop_header_branch
      %37 = sbr.rel (%p35) target = $region8
    $region5: #{tpu_custom_call.1} parent=1 // loop_body
      %s39 = ssub.s32 %s34, 1
      %s40 = ssub.s32 %s34, 2
      %s41 = sadd.s32 %s34, 1
      %s42 = sld [smem:[#allocation5 + %s34]]
      %s43 = sld [smem:[#allocation5 + %s41]]
      %s44 = ssub.s32 %s42, %s43
      %p45 = scmp.eq.s32.totalorder %s44, 0
      %s47 = sadd.s32 %s46, 1
      %s48 = scalar_select %p45, %s46, %s47
      %p51 = pneg %p45
      %p52 = scmp.eq.s32.totalorder %s34, 2
      %p53 = por %p51, %p52
      %p54 = scmp.ne.s32.totalorder %s46, %s49
      %p55 = scmp.eq.s32.totalorder %s34, 0
      %p56 = por %p54, %p55
      %p57 = scmp.ne.s32.totalorder %s46, %s49
      %p58 = scmp.eq.s32.totalorder %s39, 2
      %p59 = por %p57, %p58
      %p60 = scmp.ne.s32.totalorder %s49, %s50
      %p61 = scmp.eq.s32.totalorder %s39, 0
      %p62 = por %p60, %p61
      %p63 = scmp.ne.s32.totalorder %s49, %s50
      %p64 = scmp.eq.s32.totalorder %s40, 2
      %p65 = por %p63, %p64
      %p67 = scmp.ne.s32.totalorder %s50, %s66
      %p68 = scmp.eq.s32.totalorder %s40, 0
      %p69 = por %p67, %p68
      %s70 = sld [smem:[#allocation6 + %s34]]
      %s71 = sld [smem:[#allocation6 + %s41]]
      %s72 = ssub.s32 %s70, %s71
      %p73 = scmp.eq.s32.totalorder %s72, 0
      %s75 = sadd.s32 %s74, 1
      %s76 = scalar_select %p73, %s74, %s75
      %p79 = pneg %p73
      %p80 = scmp.eq.s32.totalorder %s34, 2
      %p81 = por %p79, %p80
      %p82 = scmp.ne.s32.totalorder %s74, %s77
      %p83 = scmp.eq.s32.totalorder %s34, 0
      %p84 = por %p82, %p83
      %p85 = scmp.ne.s32.totalorder %s74, %s77
      %p86 = scmp.eq.s32.totalorder %s39, 2
      %p87 = por %p85, %p86
      %p88 = scmp.ne.s32.totalorder %s77, %s78
      %p89 = scmp.eq.s32.totalorder %s39, 0
      %p90 = por %p88, %p89
      %p91 = scmp.ne.s32.totalorder %s77, %s78
      %p92 = scmp.eq.s32.totalorder %s40, 2
      %p93 = por %p91, %p92
      %p95 = scmp.ne.s32.totalorder %s78, %s94
      %p96 = scmp.eq.s32.totalorder %s40, 0
      %p97 = por %p95, %p96
      %s99 = sadd.s32 %s98, 1
      %p102 = scmp.eq.s32.totalorder %s34, 2
      %p103 = scmp.ne.s32.totalorder %s98, %s100
      %p104 = scmp.eq.s32.totalorder %s34, 0
      %p105 = por %p103, %p104
      %p106 = scmp.ne.s32.totalorder %s98, %s100
      %p107 = scmp.eq.s32.totalorder %s39, 2
      %p108 = por %p106, %p107
      %p109 = scmp.ne.s32.totalorder %s100, %s101
      %p110 = scmp.eq.s32.totalorder %s39, 0
      %p111 = por %p109, %p110
      %p112 = scmp.ne.s32.totalorder %s100, %s101
      %p113 = scmp.eq.s32.totalorder %s40, 2
      %p114 = por %p112, %p113
      %p116 = scmp.ne.s32.totalorder %s101, %s115
      %p117 = scmp.eq.s32.totalorder %s40, 0
      %p118 = por %p116, %p117
      %s120 = sadd.s32 %s119, 1
      %p123 = scmp.eq.s32.totalorder %s34, 2
      %p124 = scmp.ne.s32.totalorder %s119, %s121
      %p125 = scmp.eq.s32.totalorder %s34, 0
      %p126 = por %p124, %p125
      %p127 = scmp.ne.s32.totalorder %s119, %s121
      %p128 = scmp.eq.s32.totalorder %s39, 2
      %p129 = por %p127, %p128
      %p130 = scmp.ne.s32.totalorder %s121, %s122
      %p131 = scmp.eq.s32.totalorder %s39, 0
      %p132 = por %p130, %p131
      %p133 = scmp.ne.s32.totalorder %s121, %s122
      %p134 = scmp.eq.s32.totalorder %s40, 2
      %p135 = por %p133, %p134
      %p137 = scmp.ne.s32.totalorder %s122, %s136
      %p138 = scmp.eq.s32.totalorder %s40, 0
      %p139 = por %p137, %p138
      %s140 = sld [smem:[#allocation5 + %s34]]
      %s141 = sld [smem:[#allocation5 + %s41]]
      %s142 = ssub.s32 %s140, %s141
      %p143 = scmp.eq.s32.totalorder %s142, 0
      %s145 = sadd.s32 %s144, 1
      %s146 = scalar_select %p143, %s144, %s145
      %p149 = pneg %p143
      %p150 = scmp.eq.s32.totalorder %s34, 2
      %p151 = por %p149, %p150
      %p152 = scmp.ne.s32.totalorder %s144, %s147
      %p153 = scmp.eq.s32.totalorder %s34, 0
      %p154 = por %p152, %p153
      %p155 = scmp.ne.s32.totalorder %s144, %s147
      %p156 = scmp.eq.s32.totalorder %s39, 2
      %p157 = por %p155, %p156
      %p158 = scmp.ne.s32.totalorder %s147, %s148
      %p159 = scmp.eq.s32.totalorder %s39, 0
      %p160 = por %p158, %p159
      %p161 = scmp.ne.s32.totalorder %s147, %s148
      %p162 = scmp.eq.s32.totalorder %s40, 2
      %p163 = por %p161, %p162
      %p165 = scmp.ne.s32.totalorder %s148, %s164
      %p166 = scmp.eq.s32.totalorder %s40, 0
      %p167 = por %p165, %p166
      %s168 = sld [smem:[#allocation6 + %s34]]
      %s169 = sld [smem:[#allocation6 + %s41]]
      %s170 = ssub.s32 %s168, %s169
      %p171 = scmp.eq.s32.totalorder %s170, 0
      %s173 = sadd.s32 %s172, 1
      %s174 = scalar_select %p171, %s172, %s173
      %p177 = pneg %p171
      %p178 = scmp.eq.s32.totalorder %s34, 2
      %p179 = por %p177, %p178
      %p180 = scmp.ne.s32.totalorder %s172, %s175
      %p181 = scmp.eq.s32.totalorder %s34, 0
      %p182 = por %p180, %p181
      %p183 = scmp.ne.s32.totalorder %s172, %s175
      %p184 = scmp.eq.s32.totalorder %s39, 2
      %p185 = por %p183, %p184
      %p186 = scmp.ne.s32.totalorder %s175, %s176
      %p187 = scmp.eq.s32.totalorder %s39, 0
      %p188 = por %p186, %p187
      %p189 = scmp.ne.s32.totalorder %s175, %s176
      %p190 = scmp.eq.s32.totalorder %s40, 2
      %p191 = por %p189, %p190
      %p193 = scmp.ne.s32.totalorder %s176, %s192
      %p194 = scmp.eq.s32.totalorder %s40, 0
      %p195 = por %p193, %p194
      %s196 = sld [smem:[#allocation5 + %s34]]
      %s197 = sld [smem:[#allocation5 + %s41]]
      %s198 = ssub.s32 %s196, %s197
      %p199 = scmp.eq.s32.totalorder %s198, 0
      %s201 = sadd.s32 %s200, 1
      %s202 = scalar_select %p199, %s200, %s201
      %p205 = pneg %p199
      %p206 = scmp.eq.s32.totalorder %s34, 2
      %p207 = por %p205, %p206
      %p208 = scmp.ne.s32.totalorder %s200, %s203
      %p209 = scmp.eq.s32.totalorder %s34, 0
      %p210 = por %p208, %p209
      %p211 = scmp.ne.s32.totalorder %s200, %s203
      %p212 = scmp.eq.s32.totalorder %s39, 2
      %p213 = por %p211, %p212
      %p214 = scmp.ne.s32.totalorder %s203, %s204
      %p215 = scmp.eq.s32.totalorder %s39, 0
      %p216 = por %p214, %p215
      %p217 = scmp.ne.s32.totalorder %s203, %s204
      %p218 = scmp.eq.s32.totalorder %s40, 2
      %p219 = por %p217, %p218
      %p221 = scmp.ne.s32.totalorder %s204, %s220
      %p222 = scmp.eq.s32.totalorder %s40, 0
      %p223 = por %p221, %p222
      %s224 = sld [smem:[#allocation6 + %s34]]
      %s225 = sld [smem:[#allocation6 + %s41]]
      %s226 = ssub.s32 %s224, %s225
      %p227 = scmp.eq.s32.totalorder %s226, 0
      %s229 = sadd.s32 %s228, 1
      %s230 = scalar_select %p227, %s228, %s229
      %p233 = pneg %p227
      %p234 = scmp.eq.s32.totalorder %s34, 2
      %p235 = por %p233, %p234
      %p236 = scmp.ne.s32.totalorder %s228, %s231
      %p237 = scmp.eq.s32.totalorder %s34, 0
      %p238 = por %p236, %p237
      %p239 = scmp.ne.s32.totalorder %s228, %s231
      %p240 = scmp.eq.s32.totalorder %s39, 2
      %p241 = por %p239, %p240
      %p242 = scmp.ne.s32.totalorder %s231, %s232
      %p243 = scmp.eq.s32.totalorder %s39, 0
      %p244 = por %p242, %p243
      %p245 = scmp.ne.s32.totalorder %s231, %s232
      %p246 = scmp.eq.s32.totalorder %s40, 2
      %p247 = por %p245, %p246
      %p249 = scmp.ne.s32.totalorder %s232, %s248
      %p250 = scmp.eq.s32.totalorder %s40, 0
      %p251 = por %p249, %p250
      %s252 = sld [smem:[#allocation5 + %s34]]
      %s253 = sld [smem:[#allocation5 + %s41]]
      %s254 = ssub.s32 %s252, %s253
      %p255 = scmp.eq.s32.totalorder %s254, 0
      %s257 = sadd.s32 %s256, 1
      %s258 = scalar_select %p255, %s256, %s257
      %p261 = pneg %p255
      %p262 = scmp.eq.s32.totalorder %s34, 2
      %p263 = por %p261, %p262
      %p264 = scmp.ne.s32.totalorder %s256, %s259
      %p265 = scmp.eq.s32.totalorder %s34, 0
      %p266 = por %p264, %p265
      %p267 = scmp.ne.s32.totalorder %s256, %s259
      %p268 = scmp.eq.s32.totalorder %s39, 2
      %p269 = por %p267, %p268
      %p270 = scmp.ne.s32.totalorder %s259, %s260
      %p271 = scmp.eq.s32.totalorder %s39, 0
      %p272 = por %p270, %p271
      %p273 = scmp.ne.s32.totalorder %s259, %s260
      %p274 = scmp.eq.s32.totalorder %s40, 2
      %p275 = por %p273, %p274
      %p277 = scmp.ne.s32.totalorder %s260, %s276
      %p278 = scmp.eq.s32.totalorder %s40, 0
      %p279 = por %p277, %p278
      %s280 = sld [smem:[#allocation5 + %s34]]
      %s281 = sld [smem:[#allocation5 + %s41]]
      %s282 = ssub.s32 %s280, %s281
      %p283 = scmp.eq.s32.totalorder %s282, 0
      %s285 = sadd.s32 %s284, 1
      %s286 = scalar_select %p283, %s284, %s285
      %p289 = pneg %p283
      %p290 = scmp.eq.s32.totalorder %s34, 2
      %p291 = por %p289, %p290
      %p292 = scmp.ne.s32.totalorder %s284, %s287
      %p293 = scmp.eq.s32.totalorder %s34, 0
      %p294 = por %p292, %p293
      %p295 = scmp.ne.s32.totalorder %s284, %s287
      %p296 = scmp.eq.s32.totalorder %s39, 2
      %p297 = por %p295, %p296
      %p298 = scmp.ne.s32.totalorder %s287, %s288
      %p299 = scmp.eq.s32.totalorder %s39, 0
      %p300 = por %p298, %p299
      %p301 = scmp.ne.s32.totalorder %s287, %s288
      %p302 = scmp.eq.s32.totalorder %s40, 2
      %p303 = por %p301, %p302
      %p305 = scmp.ne.s32.totalorder %s288, %s304
      %p306 = scmp.eq.s32.totalorder %s40, 0
      %p307 = por %p305, %p306
      %p308 = scmp.le.s32.totalorder 1, %s34
      %p309 = scmp.lt.s32.totalorder %s34, 4
      %p310 = pnand %p308, %p309
      %p311 = pneg %p310
      // Predicated region
      $region9: #{tpu_custom_call.1} parent=5 // pred_check
        _
      $region10: #{tpu_custom_call.1} parent=5 // pred_check_branch
        %313 = sbr.rel (%p310) target = $region12
      $region11: #{tpu_custom_call.1} parent=5 // pred_region
        %s314 = ssub.s32 %s34, 1
        // Predicated region
        $region13: #{tpu_custom_call.1} parent=11 // pred_check
          %p315 = pneg %p111
        $region14: #{tpu_custom_call.1} parent=11 // pred_check_branch
          %317 = sbr.rel (%p315) target = $region16
        $region15: #{tpu_custom_call.1} parent=11 // pred_region
          _
        $region16: #{tpu_custom_call.1} parent=11 // pred_fallthru
          _
        // Predicated region
        $region17: #{tpu_custom_call.1} parent=11 // pred_check
          %p318 = pneg %p132
        $region18: #{tpu_custom_call.1} parent=11 // pred_check_branch
          %320 = sbr.rel (%p318) target = $region20
        $region19: #{tpu_custom_call.1} parent=11 // pred_region
          _
        $region20: #{tpu_custom_call.1} parent=11 // pred_fallthru
          _
      $region12: #{tpu_custom_call.1} parent=5 // pred_fallthru
        _
      %p321 = scmp.lt.s32.totalorder %s34, 3
      // Predicated region
      $region21: #{tpu_custom_call.1} parent=5 // pred_check
        %p322 = pneg %p321
      $region22: #{tpu_custom_call.1} parent=5 // pred_check_branch
        %324 = sbr.rel (%p322) target = $region24
      $region23: #{tpu_custom_call.1} parent=5 // pred_region
        // Predicated region
        $region25: #{tpu_custom_call.1} parent=23 // pred_check
          %p325 = pneg %p56
        $region26: #{tpu_custom_call.1} parent=23 // pred_check_branch
          %327 = sbr.rel (%p325) target = $region28
        $region27: #{tpu_custom_call.1} parent=23 // pred_region
          %s328 = sld [smem:[#allocation5 + %s34]]
          %s329 = smul.u32 16, %s328
          %p330 = scmp.lt.s32.totalorder %s329, 31
          %s331 = scalar_select %p330, %s329, 31
          %s332 = smul.addr %s331, 8
          %s333 = scalar_lea.vmem %s2, %s332
          %s334 = sld [smem:[#allocation5 + %s34]]
          %s335 = smul.u32 16, %s334
        $region28: #{tpu_custom_call.1} parent=23 // pred_fallthru
          _
        // Predicated region
        $region29: #{tpu_custom_call.1} parent=23 // pred_check
          %p336 = pneg %p84
        $region30: #{tpu_custom_call.1} parent=23 // pred_check_branch
          %338 = sbr.rel (%p336) target = $region32
        $region31: #{tpu_custom_call.1} parent=23 // pred_region
          %s339 = sld [smem:[#allocation6 + %s34]]
          %s340 = smul.u32 16, %s339
          %p341 = scmp.lt.s32.totalorder %s340, 31
          %s342 = scalar_select %p341, %s340, 31
          %s343 = smul.addr %s342, 8
          %s344 = scalar_lea.vmem %s3, %s343
          %s345 = sld [smem:[#allocation6 + %s34]]
          %s346 = smul.u32 16, %s345
        $region32: #{tpu_custom_call.1} parent=23 // pred_fallthru
          _
        // Predicated region
        $region33: #{tpu_custom_call.1} parent=23 // pred_check
          %p347 = pneg %p154
        $region34: #{tpu_custom_call.1} parent=23 // pred_check_branch
          %349 = sbr.rel (%p347) target = $region36
        $region35: #{tpu_custom_call.1} parent=23 // pred_region
          %s350 = sld [smem:[#allocation5 + %s34]]
          %s351 = smul.u32 16, %s350
          %p352 = scmp.lt.s32.totalorder %s351, 31
          %s353 = scalar_select %p352, %s351, 31
          %s354 = smul.addr %s353, 8
          %s355 = scalar_lea.vmem %s6, %s354
          %s356 = sld [smem:[#allocation5 + %s34]]
          %s357 = smul.u32 16, %s356
        $region36: #{tpu_custom_call.1} parent=23 // pred_fallthru
          _
        // Predicated region
        $region37: #{tpu_custom_call.1} parent=23 // pred_check
          %p358 = pneg %p182
        $region38: #{tpu_custom_call.1} parent=23 // pred_check_branch
          %360 = sbr.rel (%p358) target = $region40
        $region39: #{tpu_custom_call.1} parent=23 // pred_region
          %s361 = sld [smem:[#allocation6 + %s34]]
          %p362 = scmp.lt.s32.totalorder %s361, 1
          %s363 = scalar_select %p362, %s361, 1
          %s364 = scalar_lea.vmem %s7, %s363
          %s365 = sld [smem:[#allocation6 + %s34]]
        $region40: #{tpu_custom_call.1} parent=23 // pred_fallthru
          _
        // Predicated region
        $region41: #{tpu_custom_call.1} parent=23 // pred_check
          %p366 = pneg %p210
        $region42: #{tpu_custom_call.1} parent=23 // pred_check_branch
          %368 = sbr.rel (%p366) target = $region44
        $region43: #{tpu_custom_call.1} parent=23 // pred_region
          %s369 = sld [smem:[#allocation5 + %s34]]
          %s370 = smul.u32 16, %s369
          %p371 = scmp.lt.s32.totalorder %s370, 31
          %s372 = scalar_select %p371, %s370, 31
          %s373 = smul.addr %s372, 8
          %s374 = scalar_lea.vmem %s8, %s373
          %s375 = sld [smem:[#allocation5 + %s34]]
          %s376 = smul.u32 16, %s375
        $region44: #{tpu_custom_call.1} parent=23 // pred_fallthru
          _
        // Predicated region
        $region45: #{tpu_custom_call.1} parent=23 // pred_check
          %p377 = pneg %p238
        $region46: #{tpu_custom_call.1} parent=23 // pred_check_branch
          %379 = sbr.rel (%p377) target = $region48
        $region47: #{tpu_custom_call.1} parent=23 // pred_region
          %s380 = sld [smem:[#allocation6 + %s34]]
          %p381 = scmp.lt.s32.totalorder %s380, 1
          %s382 = scalar_select %p381, %s380, 1
          %s383 = scalar_lea.vmem %s9, %s382
          %s384 = sld [smem:[#allocation6 + %s34]]
        $region48: #{tpu_custom_call.1} parent=23 // pred_fallthru
          _
      $region24: #{tpu_custom_call.1} parent=5 // pred_fallthru
        _
      %p385 = scmp.le.s32.totalorder 1, %s34
      %p386 = scmp.lt.s32.totalorder %s34, 4
      %p387 = pnand %p385, %p386
      %p388 = pneg %p387
      // Predicated region
      $region49: #{tpu_custom_call.1} parent=5 // pred_check
        _
      $region50: #{tpu_custom_call.1} parent=5 // pred_check_branch
        %390 = sbr.rel (%p387) target = $region52
      $region51: #{tpu_custom_call.1} parent=5 // pred_region
        %s391 = ssub.s32 %s34, 1
        %s392 = sld [smem:[#allocation5 + %s39]]
        %s393 = smul.u32 16, %s392
        %p394 = scmp.lt.s32.totalorder %s393, 31
        %s395 = scalar_select %p394, %s393, 31
        %s396 = smul.addr %s395, 8
        %s397 = scalar_lea.vmem %s2, %s396
        %p398 = pneg %p62
        %p399 = pneg %p59
        %s400 = sld [smem:[#allocation6 + %s39]]
        %s401 = smul.u32 16, %s400
        %p402 = scmp.lt.s32.totalorder %s401, 31
        %s403 = scalar_select %p402, %s401, 31
        %s404 = smul.addr %s403, 8
        %s405 = scalar_lea.vmem %s3, %s404
        %p406 = pneg %p90
        %p407 = pneg %p87
        %p408 = pneg %p111
        %p409 = pneg %p108
        %p410 = pneg %p132
        %p411 = pneg %p129
        %s412 = sld [smem:[#allocation5 + %s39]]
        %s413 = smul.u32 16, %s412
        %p414 = scmp.lt.s32.totalorder %s413, 31
        %s415 = scalar_select %p414, %s413, 31
        %s416 = smul.addr %s415, 8
        %s417 = scalar_lea.vmem %s6, %s416
        %p418 = pneg %p160
        %p419 = pneg %p157
        %s420 = sld [smem:[#allocation6 + %s39]]
        %p421 = scmp.lt.s32.totalorder %s420, 1
        %s422 = scalar_select %p421, %s420, 1
        %s423 = scalar_lea.vmem %s7, %s422
        %p424 = pneg %p188
        %p425 = pneg %p185
        %s426 = sld [smem:[#allocation5 + %s39]]
        %s427 = smul.u32 16, %s426
        %p428 = scmp.lt.s32.totalorder %s427, 31
        %s429 = scalar_select %p428, %s427, 31
        %s430 = smul.addr %s429, 8
        %s431 = scalar_lea.vmem %s8, %s430
        %p432 = pneg %p216
        %p433 = pneg %p213
        %s434 = sld [smem:[#allocation6 + %s39]]
        %p435 = scmp.lt.s32.totalorder %s434, 1
        %s436 = scalar_select %p435, %s434, 1
        %s437 = scalar_lea.vmem %s9, %s436
        %p438 = pneg %p244
        %p439 = pneg %p241
        %p440 = pneg %p272
        %p441 = pneg %p269
        %s442 = sand.u32 %s259, 1
        %s443 = scalar_lea.sflag [#allocation8], %s442
        %s444 = sand.u32 %s259, 1
        %s445 = smul.addr %s444, 8
        %s446 = scalar_lea.vmem [#allocation7], %s445
        %p447 = pneg %p300
        %p448 = pneg %p297
        %s449 = sand.u32 %s287, 1
        %s450 = scalar_lea.sflag [#allocation10], %s449
        %s451 = sand.u32 %s287, 1
        %s452 = smul.addr %s451, 128
        %s453 = scalar_lea.vmem [#allocation9], %s452
        %s454 = sld [smem:[#allocation5 + %s39]]
        %s455 = smul.u32 16, %s454
        %p456 = scmp.lt.s32.totalorder %s455, 31
        %s457 = scalar_select %p456, %s455, 31
        %s458 = smul.addr %s457, 8
        %s459 = scalar_lea.vmem %s2, %s458
        %s460 = sld [smem:[#allocation5 + %s39]]
        %s461 = smul.u32 16, %s460
        %s462 = sld [smem:[#allocation6 + %s39]]
        %s463 = smul.u32 16, %s462
        %p464 = scmp.lt.s32.totalorder %s463, 31
        %s465 = scalar_select %p464, %s463, 31
        %s466 = smul.addr %s465, 8
        %s467 = scalar_lea.vmem %s3, %s466
        %s468 = sld [smem:[#allocation6 + %s39]]
        %s469 = smul.u32 16, %s468
        %s470 = sld [smem:[#allocation5 + %s39]]
        %s471 = smul.u32 16, %s470
        %p472 = scmp.lt.s32.totalorder %s471, 31
        %s473 = scalar_select %p472, %s471, 31
        %s474 = smul.addr %s473, 8
        %s475 = scalar_lea.vmem %s6, %s474
        %s476 = sld [smem:[#allocation5 + %s39]]
        %s477 = smul.u32 16, %s476
        %s478 = sld [smem:[#allocation6 + %s39]]
        %p479 = scmp.lt.s32.totalorder %s478, 1
        %s480 = scalar_select %p479, %s478, 1
        %s481 = scalar_lea.vmem %s7, %s480
        %s482 = sld [smem:[#allocation6 + %s39]]
        %s483 = sld [smem:[#allocation5 + %s39]]
        %s484 = smul.u32 16, %s483
        %p485 = scmp.lt.s32.totalorder %s484, 31
        %s486 = scalar_select %p485, %s484, 31
        %s487 = smul.addr %s486, 8
        %s488 = scalar_lea.vmem %s8, %s487
        %s489 = sld [smem:[#allocation5 + %s39]]
        %s490 = smul.u32 16, %s489
        %s491 = sld [smem:[#allocation6 + %s39]]
        %p492 = scmp.lt.s32.totalorder %s491, 1
        %s493 = scalar_select %p492, %s491, 1
        %s494 = scalar_lea.vmem %s9, %s493
        %s495 = sld [smem:[#allocation6 + %s39]]
        %s496 = sld [smem:[#allocation5 + %s39]]
        %s497 = sld [smem:[#allocation5 + %s39]]
        %s498 = smul.u32 16, %s497
        %s499 = sld [smem:[#allocation5 + %s39]]
        %s500 = sld [smem:[#allocation6 + %s39]]
        %v501 = vld [vmem:[%s459] sm:$0xff]
        %v502 = vld [vmem:[%s459 + $0x8] sm:$0xff]
        %v503 = vld [vmem:[%s459 + $0x10] sm:$0xff]
        %v504 = vld [vmem:[%s459 + $0x18] sm:$0xff]
        %v505 = vld [vmem:[%s459 + $0x20] sm:$0xff]
        %v506 = vld [vmem:[%s459 + $0x28] sm:$0xff]
        %v507 = vld [vmem:[%s459 + $0x30] sm:$0xff]
        %v508 = vld [vmem:[%s459 + $0x38] sm:$0xff]
        %v509 = vld [vmem:[%s459 + $0x40] sm:$0xff]
        %v510 = vld [vmem:[%s459 + $0x48] sm:$0xff]
        %v511 = vld [vmem:[%s459 + $0x50] sm:$0xff]
        %v512 = vld [vmem:[%s459 + $0x58] sm:$0xff]
        %v513 = vld [vmem:[%s459 + $0x60] sm:$0xff]
        %v514 = vld [vmem:[%s459 + $0x68] sm:$0xff]
        %v515 = vld [vmem:[%s459 + $0x70] sm:$0xff]
        %v516 = vld [vmem:[%s459 + $0x78] sm:$0xff]
        %v517 = vld [vmem:[%s488] sm:$0xff]
        %v518 = vld [vmem:[%s488 + $0x8] sm:$0xff]
        %v519 = vld [vmem:[%s488 + $0x10] sm:$0xff]
        %v520 = vld [vmem:[%s488 + $0x18] sm:$0xff]
        %v521 = vld [vmem:[%s488 + $0x20] sm:$0xff]
        %v522 = vld [vmem:[%s488 + $0x28] sm:$0xff]
        %v523 = vld [vmem:[%s488 + $0x30] sm:$0xff]
        %v524 = vld [vmem:[%s488 + $0x38] sm:$0xff]
        %v525 = vld [vmem:[%s488 + $0x40] sm:$0xff]
        %v526 = vld [vmem:[%s488 + $0x48] sm:$0xff]
        %v527 = vld [vmem:[%s488 + $0x50] sm:$0xff]
        %v528 = vld [vmem:[%s488 + $0x58] sm:$0xff]
        %v529 = vld [vmem:[%s488 + $0x60] sm:$0xff]
        %v530 = vld [vmem:[%s488 + $0x68] sm:$0xff]
        %v531 = vld [vmem:[%s488 + $0x70] sm:$0xff]
        %v532 = vld [vmem:[%s488 + $0x78] sm:$0xff]
        %v533 = vld [vmem:[%s494] sm:$0x1]
        %v534 = vld [vmem:[%s475] sm:$0xff]
        %v535 = vld [vmem:[%s475 + $0x8] sm:$0xff]
        %v536 = vld [vmem:[%s475 + $0x10] sm:$0xff]
        %v537 = vld [vmem:[%s475 + $0x18] sm:$0xff]
        %v538 = vld [vmem:[%s475 + $0x20] sm:$0xff]
        %v539 = vld [vmem:[%s475 + $0x28] sm:$0xff]
        %v540 = vld [vmem:[%s475 + $0x30] sm:$0xff]
        %v541 = vld [vmem:[%s475 + $0x38] sm:$0xff]
        %v542 = vld [vmem:[%s475 + $0x40] sm:$0xff]
        %v543 = vld [vmem:[%s475 + $0x48] sm:$0xff]
        %v544 = vld [vmem:[%s475 + $0x50] sm:$0xff]
        %v545 = vld [vmem:[%s475 + $0x58] sm:$0xff]
        %v546 = vld [vmem:[%s475 + $0x60] sm:$0xff]
        %v547 = vld [vmem:[%s475 + $0x68] sm:$0xff]
        %v548 = vld [vmem:[%s475 + $0x70] sm:$0xff]
        %v549 = vld [vmem:[%s475 + $0x78] sm:$0xff]
        %v550 = vld [vmem:[%s481] sm:$0x1]
        %vm551 = vcmp.ge.s32.totalorder %v517, 0
        %vm552 = vcmp.ge.s32.totalorder %v518, 0
        %vm553 = vcmp.ge.s32.totalorder %v519, 0
        %vm554 = vcmp.ge.s32.totalorder %v520, 0
        %vm555 = vcmp.ge.s32.totalorder %v521, 0
        %vm556 = vcmp.ge.s32.totalorder %v522, 0
        %vm557 = vcmp.ge.s32.totalorder %v523, 0
        %vm558 = vcmp.ge.s32.totalorder %v524, 0
        %vm559 = vcmp.ge.s32.totalorder %v525, 0
        %vm560 = vcmp.ge.s32.totalorder %v526, 0
        %vm561 = vcmp.ge.s32.totalorder %v527, 0
        %vm562 = vcmp.ge.s32.totalorder %v528, 0
        %vm563 = vcmp.ge.s32.totalorder %v529, 0
        %vm564 = vcmp.ge.s32.totalorder %v530, 0
        %vm565 = vcmp.ge.s32.totalorder %v531, 0
        %vm566 = vcmp.ge.s32.totalorder %v532, 0
        %vm567 = vcmp.ge.s32.totalorder %v533, 0
        %p568 = scmp.eq.s32.totalorder %s500, 0
        // Predicated region
        $region53: #{tpu_custom_call.1} parent=51 // pred_check
          %p569 = pneg %p568
        $region54: #{tpu_custom_call.1} parent=51 // pred_check_branch
          %571 = sbr.rel (%p569) target = $region56
        $region55: #{tpu_custom_call.1} parent=51 // pred_region
          %572 = vst [vmem:[#allocation3] sm:$0x1] 0.0
          %v573 = vld [vmem:[%s4] sm:$0xff]
          %v574 = vld [vmem:[%s4 + $0x8] sm:$0xff]
          %v575 = vld [vmem:[%s4 + $0x10] sm:$0xff]
          %v576 = vld [vmem:[%s4 + $0x18] sm:$0xff]
          %v577 = vld [vmem:[%s4 + $0x20] sm:$0xff]
          %v578 = vld [vmem:[%s4 + $0x28] sm:$0xff]
          %v579 = vld [vmem:[%s4 + $0x30] sm:$0xff]
          %v580 = vld [vmem:[%s4 + $0x38] sm:$0xff]
          %vm581 = vcmask 523264
          %v583 = vsel %vm581, %v501, 0
          %v586 = vsel %vm581, %v502, 0
          %v589 = vsel %vm581, %v503, 0
          %v592 = vsel %vm581, %v504, 0
          %v595 = vsel %vm581, %v505, 0
          %v598 = vsel %vm581, %v506, 0
          %v601 = vsel %vm581, %v507, 0
          %v604 = vsel %vm581, %v508, 0
          %v607 = vsel %vm581, %v509, 0
          %v610 = vsel %vm581, %v510, 0
          %v613 = vsel %vm581, %v511, 0
          %v616 = vsel %vm581, %v512, 0
          %v619 = vsel %vm581, %v513, 0
          %v622 = vsel %vm581, %v514, 0
          %v625 = vsel %vm581, %v515, 0
          %v628 = vsel %vm581, %v516, 0
          %630 = vmatprep.subr.mxu0 0.0
          %631 = vmatpush1.msra.mxu0 0.0
          %632 = vmatprep.subr.mxu0 0.0
          %633 = vmatpush1.msra.mxu0 0.0
          %634 = vmatprep.subr.mxu0 0.0
          %635 = vmatpush1.msra.mxu0 0.0
          %636 = vmatprep.subr.mxu0 0.0
          %637 = vmatpush1.msra.mxu0 0.0
          %638 = vmatprep.subr.mxu0 0.0
          %639 = vmatpush1.msra.mxu0 0.0
          %640 = vmatprep.subr.mxu0 0.0
          %641 = vmatpush1.msra.mxu0 0.0
          %642 = vmatprep.subr.mxu0 0.0
          %643 = vmatpush1.msra.mxu0 0.0
          %644 = vmatprep.subr.mxu0 0.0
          %645 = vmatpush1.msra.mxu0 0.0
          %646 = vmatprep.subr.mxu0 0.0
          %647 = vmatpush1.msra.mxu0 %v580
          %648 = vmatprep.subr.mxu0 0.0
          %649 = vmatpush1.msra.mxu0 %v579
          %650 = vmatprep.subr.mxu0 0.0
          %651 = vmatpush1.msra.mxu0 %v578
          %652 = vmatprep.subr.mxu0 0.0
          %653 = vmatpush1.msra.mxu0 %v577
          %654 = vmatprep.subr.mxu0 0.0
          %655 = vmatpush1.msra.mxu0 %v576
          %656 = vmatprep.subr.mxu0 0.0
          %657 = vmatpush1.msra.mxu0 %v575
          %658 = vmatprep.subr.mxu0 0.0
          %659 = vmatpush1.msra.mxu0 %v574
          %660 = vmatprep.subr.mxu0 0.0
          %661 = vmatpush1.msra.mxu0 %v573
          %662 = vmatprep.subr.mxu0 0.0
          %663 = vmatpush2.msra.mxu0 0.0
          %664 = vmatprep.subr.mxu0 0.0
          %665 = vmatpush2.msra.mxu0 0.0
          %666 = vmatprep.subr.mxu0 0.0
          %667 = vmatpush2.msra.mxu0 0.0
          %668 = vmatprep.subr.mxu0 0.0
          %669 = vmatpush2.msra.mxu0 0.0
          %670 = vmatprep.subr.mxu0 0.0
          %671 = vmatpush2.msra.mxu0 0.0
          %672 = vmatprep.subr.mxu0 0.0
          %673 = vmatpush2.msra.mxu0 0.0
          %674 = vmatprep.subr.mxu0 0.0
          %675 = vmatpush2.msra.mxu0 0.0
          %676 = vmatprep.subr.mxu0 0.0
          %677 = vmatpush2.msra.mxu0 0.0
          %678 = vmatprep.subr.mxu0 0.0
          %679 = vmatpush2.msra.mxu0 0.0
          %680 = vmatprep.subr.mxu0 0.0
          %681 = vmatpush2.msra.mxu0 0.0
          %682 = vmatprep.subr.mxu0 0.0
          %683 = vmatpush2.msra.mxu0 0.0
          %684 = vmatprep.subr.mxu0 0.0
          %685 = vmatpush2.msra.mxu0 0.0
          %686 = vmatprep.subr.mxu0 0.0
          %687 = vmatpush2.msra.mxu0 0.0
          %688 = vmatprep.subr.mxu0 0.0
          %689 = vmatpush2.msra.mxu0 0.0
          %690 = vmatprep.subr.mxu0 0.0
          %691 = vmatpush2.msra.mxu0 0.0
          %692 = vmatprep.subr.mxu0 0.0
          %693 = vmatpush2.msra.mxu0 0.0
          %694 = vmatprep.mubr.f32.mxu0 0.0
          %695 = vmatmul.mubr.f32.gmra.mxu0 %v583
          %v696 = vpop.f32.mrf.mxu0
          %v697 = vadd.f32 0.0, %v696
          %v698 = vpop.f32.mrf.mxu0
          %699 = vmatprep.mubr.f32.mxu0 0.0
          %700 = vmatmul.mubr.f32.gmra.mxu0 %v586
          %v701 = vpop.f32.mrf.mxu0
          %v702 = vadd.f32 0.0, %v701
          %v703 = vpop.f32.mrf.mxu0
          %704 = vmatprep.mubr.f32.mxu0 0.0
          %705 = vmatmul.mubr.f32.gmra.mxu0 %v589
          %v706 = vpop.f32.mrf.mxu0
          %v707 = vadd.f32 0.0, %v706
          %v708 = vpop.f32.mrf.mxu0
          %709 = vmatprep.mubr.f32.mxu0 0.0
          %710 = vmatmul.mubr.f32.gmra.mxu0 %v592
          %v711 = vpop.f32.mrf.mxu0
          %v712 = vadd.f32 0.0, %v711
          %v713 = vpop.f32.mrf.mxu0
          %714 = vmatprep.mubr.f32.mxu0 0.0
          %715 = vmatmul.mubr.f32.gmra.mxu0 %v595
          %v716 = vpop.f32.mrf.mxu0
          %v717 = vadd.f32 0.0, %v716
          %v718 = vpop.f32.mrf.mxu0
          %719 = vmatprep.mubr.f32.mxu0 0.0
          %720 = vmatmul.mubr.f32.gmra.mxu0 %v598
          %v721 = vpop.f32.mrf.mxu0
          %v722 = vadd.f32 0.0, %v721
          %v723 = vpop.f32.mrf.mxu0
          %724 = vmatprep.mubr.f32.mxu0 0.0
          %725 = vmatmul.mubr.f32.gmra.mxu0 %v601
          %v726 = vpop.f32.mrf.mxu0
          %v727 = vadd.f32 0.0, %v726
          %v728 = vpop.f32.mrf.mxu0
          %729 = vmatprep.mubr.f32.mxu0 0.0
          %730 = vmatmul.mubr.f32.gmra.mxu0 %v604
          %v731 = vpop.f32.mrf.mxu0
          %v732 = vadd.f32 0.0, %v731
          %v733 = vpop.f32.mrf.mxu0
          %734 = vmatprep.mubr.f32.mxu0 0.0
          %735 = vmatmul.mubr.f32.gmra.mxu0 %v607
          %v736 = vpop.f32.mrf.mxu0
          %v737 = vadd.f32 0.0, %v736
          %v738 = vpop.f32.mrf.mxu0
          %739 = vmatprep.mubr.f32.mxu0 0.0
          %740 = vmatmul.mubr.f32.gmra.mxu0 %v610
          %v741 = vpop.f32.mrf.mxu0
          %v742 = vadd.f32 0.0, %v741
          %v743 = vpop.f32.mrf.mxu0
          %744 = vmatprep.mubr.f32.mxu0 0.0
          %745 = vmatmul.mubr.f32.gmra.mxu0 %v613
          %v746 = vpop.f32.mrf.mxu0
          %v747 = vadd.f32 0.0, %v746
          %v748 = vpop.f32.mrf.mxu0
          %749 = vmatprep.mubr.f32.mxu0 0.0
          %750 = vmatmul.mubr.f32.gmra.mxu0 %v616
          %v751 = vpop.f32.mrf.mxu0
          %v752 = vadd.f32 0.0, %v751
          %v753 = vpop.f32.mrf.mxu0
          %754 = vmatprep.mubr.f32.mxu0 0.0
          %755 = vmatmul.mubr.f32.gmra.mxu0 %v619
          %v756 = vpop.f32.mrf.mxu0
          %v757 = vadd.f32 0.0, %v756
          %v758 = vpop.f32.mrf.mxu0
          %759 = vmatprep.mubr.f32.mxu0 0.0
          %760 = vmatmul.mubr.f32.gmra.mxu0 %v622
          %v761 = vpop.f32.mrf.mxu0
          %v762 = vadd.f32 0.0, %v761
          %v763 = vpop.f32.mrf.mxu0
          %764 = vmatprep.mubr.f32.mxu0 0.0
          %765 = vmatmul.mubr.f32.gmra.mxu0 %v625
          %v766 = vpop.f32.mrf.mxu0
          %v767 = vadd.f32 0.0, %v766
          %v768 = vpop.f32.mrf.mxu0
          %769 = vmatprep.mubr.f32.mxu0 0.0
          %770 = vmatmul.mubr.f32.gmra.mxu0 %v628
          %v771 = vpop.f32.mrf.mxu0
          %v772 = vadd.f32 0.0, %v771
          %v773 = vpop.f32.mrf.mxu0
          %774 = vdwg.mxu0
          %v775 = vld [vmem:[%s5] sm:$0x1]
          %777 = vset.pattern.permute.xlu0 0
          %778 = vperm.xlu0 %777, %v534
          %v779 = vpop.permute.xlu0 %778
          %782 = vset.pattern.permute.xlu0 0
          %783 = vperm.xlu0 %782, %v535
          %v784 = vpop.permute.xlu0 %783
          %787 = vset.pattern.permute.xlu0 0
          %788 = vperm.xlu0 %787, %v536
          %v789 = vpop.permute.xlu0 %788
          %792 = vset.pattern.permute.xlu0 0
          %793 = vperm.xlu0 %792, %v537
          %v794 = vpop.permute.xlu0 %793
          %797 = vset.pattern.permute.xlu0 0
          %798 = vperm.xlu0 %797, %v538
          %v799 = vpop.permute.xlu0 %798
          %802 = vset.pattern.permute.xlu0 0
          %803 = vperm.xlu0 %802, %v539
          %v804 = vpop.permute.xlu0 %803
          %807 = vset.pattern.permute.xlu0 0
          %808 = vperm.xlu0 %807, %v540
          %v809 = vpop.permute.xlu0 %808
          %812 = vset.pattern.permute.xlu0 0
          %813 = vperm.xlu0 %812, %v541
          %v814 = vpop.permute.xlu0 %813
          %817 = vset.pattern.permute.xlu0 0
          %818 = vperm.xlu0 %817, %v542
          %v819 = vpop.permute.xlu0 %818
          %822 = vset.pattern.permute.xlu0 0
          %823 = vperm.xlu0 %822, %v543
          %v824 = vpop.permute.xlu0 %823
          %827 = vset.pattern.permute.xlu0 0
          %828 = vperm.xlu0 %827, %v544
          %v829 = vpop.permute.xlu0 %828
          %832 = vset.pattern.permute.xlu0 0
          %833 = vperm.xlu0 %832, %v545
          %v834 = vpop.permute.xlu0 %833
          %837 = vset.pattern.permute.xlu0 0
          %838 = vperm.xlu0 %837, %v546
          %v839 = vpop.permute.xlu0 %838
          %842 = vset.pattern.permute.xlu0 0
          %843 = vperm.xlu0 %842, %v547
          %v844 = vpop.permute.xlu0 %843
          %847 = vset.pattern.permute.xlu0 0
          %848 = vperm.xlu0 %847, %v548
          %v849 = vpop.permute.xlu0 %848
          %852 = vset.pattern.permute.xlu0 0
          %853 = vperm.xlu0 %852, %v549
          %v854 = vpop.permute.xlu0 %853
          %v857 = vlaneseq
          %v858 = vshrl.u32 %v857, 7
          %v859 = vsub.s32 0, %v858
          %v860 = vrot.slane %v775, %v859
          %v862 = vadd.f32 %v779, %v860
          %v863 = vadd.f32 %v784, %v860
          %v864 = vadd.f32 %v789, %v860
          %v865 = vadd.f32 %v794, %v860
          %v866 = vadd.f32 %v799, %v860
          %v867 = vadd.f32 %v804, %v860
          %v868 = vadd.f32 %v809, %v860
          %v869 = vadd.f32 %v814, %v860
          %v870 = vadd.f32 %v819, %v860
          %v871 = vadd.f32 %v824, %v860
          %v872 = vadd.f32 %v829, %v860
          %v873 = vadd.f32 %v834, %v860
          %v874 = vadd.f32 %v839, %v860
          %v875 = vadd.f32 %v844, %v860
          %v876 = vadd.f32 %v849, %v860
          %v877 = vadd.f32 %v854, %v860
          %v878 = vmul.f32 %v697, 2.0
          %v879 = vmul.f32 %v702, 2.0
          %v880 = vmul.f32 %v707, 2.0
          %v881 = vmul.f32 %v712, 2.0
          %v882 = vmul.f32 %v717, 2.0
          %v883 = vmul.f32 %v722, 2.0
          %v884 = vmul.f32 %v727, 2.0
          %v885 = vmul.f32 %v732, 2.0
          %v886 = vmul.f32 %v737, 2.0
          %v887 = vmul.f32 %v742, 2.0
          %v888 = vmul.f32 %v747, 2.0
          %v889 = vmul.f32 %v752, 2.0
          %v890 = vmul.f32 %v757, 2.0
          %v891 = vmul.f32 %v762, 2.0
          %v892 = vmul.f32 %v767, 2.0
          %v893 = vmul.f32 %v772, 2.0
          %v894 = vsub.f32 %v862, %v878
          %v895 = vsub.f32 %v863, %v879
          %v896 = vsub.f32 %v864, %v880
          %v897 = vsub.f32 %v865, %v881
          %v898 = vsub.f32 %v866, %v882
          %v899 = vsub.f32 %v867, %v883
          %v900 = vsub.f32 %v868, %v884
          %v901 = vsub.f32 %v869, %v885
          %v902 = vsub.f32 %v870, %v886
          %v903 = vsub.f32 %v871, %v887
          %v904 = vsub.f32 %v872, %v888
          %v905 = vsub.f32 %v873, %v889
          %v906 = vsub.f32 %v874, %v890
          %v907 = vsub.f32 %v875, %v891
          %v908 = vsub.f32 %v876, %v892
          %v909 = vsub.f32 %v877, %v893
          %v910 = vlaneseq
          %v911 = vand.u32 %v910, 127
          %912 = vset.pattern.permute.xlu0 0
          %913 = vperm.xlu0 %912, %v517
          %v914 = vpop.permute.xlu0 %913
          %915 = vset.pattern.permute.xlu0 0
          %916 = vperm.xlu0 %915, %v518
          %v917 = vpop.permute.xlu0 %916
          %918 = vset.pattern.permute.xlu0 0
          %919 = vperm.xlu0 %918, %v519
          %v920 = vpop.permute.xlu0 %919
          %921 = vset.pattern.permute.xlu0 0
          %922 = vperm.xlu0 %921, %v520
          %v923 = vpop.permute.xlu0 %922
          %924 = vset.pattern.permute.xlu0 0
          %925 = vperm.xlu0 %924, %v521
          %v926 = vpop.permute.xlu0 %925
          %927 = vset.pattern.permute.xlu0 0
          %928 = vperm.xlu0 %927, %v522
          %v929 = vpop.permute.xlu0 %928
          %930 = vset.pattern.permute.xlu0 0
          %931 = vperm.xlu0 %930, %v523
          %v932 = vpop.permute.xlu0 %931
          %933 = vset.pattern.permute.xlu0 0
          %934 = vperm.xlu0 %933, %v524
          %v935 = vpop.permute.xlu0 %934
          %936 = vset.pattern.permute.xlu0 0
          %937 = vperm.xlu0 %936, %v525
          %v938 = vpop.permute.xlu0 %937
          %939 = vset.pattern.permute.xlu0 0
          %940 = vperm.xlu0 %939, %v526
          %v941 = vpop.permute.xlu0 %940
          %942 = vset.pattern.permute.xlu0 0
          %943 = vperm.xlu0 %942, %v527
          %v944 = vpop.permute.xlu0 %943
          %945 = vset.pattern.permute.xlu0 0
          %946 = vperm.xlu0 %945, %v528
          %v947 = vpop.permute.xlu0 %946
          %948 = vset.pattern.permute.xlu0 0
          %949 = vperm.xlu0 %948, %v529
          %v950 = vpop.permute.xlu0 %949
          %951 = vset.pattern.permute.xlu0 0
          %952 = vperm.xlu0 %951, %v530
          %v953 = vpop.permute.xlu0 %952
          %954 = vset.pattern.permute.xlu0 0
          %955 = vperm.xlu0 %954, %v531
          %v956 = vpop.permute.xlu0 %955
          %957 = vset.pattern.permute.xlu0 0
          %958 = vperm.xlu0 %957, %v532
          %v959 = vpop.permute.xlu0 %958
          %vm960 = vcmp.eq.s32.totalorder %v914, %v911
          %vm961 = vcmp.eq.s32.totalorder %v917, %v911
          %vm962 = vcmp.eq.s32.totalorder %v920, %v911
          %vm963 = vcmp.eq.s32.totalorder %v923, %v911
          %vm964 = vcmp.eq.s32.totalorder %v926, %v911
          %vm965 = vcmp.eq.s32.totalorder %v929, %v911
          %vm966 = vcmp.eq.s32.totalorder %v932, %v911
          %vm967 = vcmp.eq.s32.totalorder %v935, %v911
          %vm968 = vcmp.eq.s32.totalorder %v938, %v911
          %vm969 = vcmp.eq.s32.totalorder %v941, %v911
          %vm970 = vcmp.eq.s32.totalorder %v944, %v911
          %vm971 = vcmp.eq.s32.totalorder %v947, %v911
          %vm972 = vcmp.eq.s32.totalorder %v950, %v911
          %vm973 = vcmp.eq.s32.totalorder %v953, %v911
          %vm974 = vcmp.eq.s32.totalorder %v956, %v911
          %vm975 = vcmp.eq.s32.totalorder %v959, %v911
          %v976 = vsel %vm960, 1, 0
          %v977 = vsel %vm961, 1, 0
          %v978 = vsel %vm962, 1, 0
          %v979 = vsel %vm963, 1, 0
          %v980 = vsel %vm964, 1, 0
          %v981 = vsel %vm965, 1, 0
          %v982 = vsel %vm966, 1, 0
          %v983 = vsel %vm967, 1, 0
          %v984 = vsel %vm968, 1, 0
          %v985 = vsel %vm969, 1, 0
          %v986 = vsel %vm970, 1, 0
          %v987 = vsel %vm971, 1, 0
          %v988 = vsel %vm972, 1, 0
          %v989 = vsel %vm973, 1, 0
          %v990 = vsel %vm974, 1, 0
          %v991 = vsel %vm975, 1, 0
          %v992 = vcvt.s32.f32 %v976
          %v993 = vcvt.s32.f32 %v977
          %v994 = vcvt.s32.f32 %v978
          %v995 = vcvt.s32.f32 %v979
          %v996 = vcvt.s32.f32 %v980
          %v997 = vcvt.s32.f32 %v981
          %v998 = vcvt.s32.f32 %v982
          %v999 = vcvt.s32.f32 %v983
          %v1000 = vcvt.s32.f32 %v984
          %v1001 = vcvt.s32.f32 %v985
          %v1002 = vcvt.s32.f32 %v986
          %v1003 = vcvt.s32.f32 %v987
          %v1004 = vcvt.s32.f32 %v988
          %v1005 = vcvt.s32.f32 %v989
          %v1006 = vcvt.s32.f32 %v990
          %v1007 = vcvt.s32.f32 %v991
          %v1008 = vmul.f32 %v894, %v992
          %v1009 = vmul.f32 %v895, %v993
          %v1010 = vmul.f32 %v896, %v994
          %v1011 = vmul.f32 %v897, %v995
          %v1012 = vmul.f32 %v898, %v996
          %v1013 = vmul.f32 %v899, %v997
          %v1014 = vmul.f32 %v900, %v998
          %v1015 = vmul.f32 %v901, %v999
          %v1016 = vmul.f32 %v902, %v1000
          %v1017 = vmul.f32 %v903, %v1001
          %v1018 = vmul.f32 %v904, %v1002
          %v1019 = vmul.f32 %v905, %v1003
          %v1020 = vmul.f32 %v906, %v1004
          %v1021 = vmul.f32 %v907, %v1005
          %v1022 = vmul.f32 %v908, %v1006
          %v1023 = vmul.f32 %v909, %v1007
          %1024 = vst [vmem:[%s453] sm:$0xff] %v1008
          %1025 = vst [vmem:[%s453 + $0x8] sm:$0xff] %v1009
          %1026 = vst [vmem:[%s453 + $0x10] sm:$0xff] %v1010
          %1027 = vst [vmem:[%s453 + $0x18] sm:$0xff] %v1011
          %1028 = vst [vmem:[%s453 + $0x20] sm:$0xff] %v1012
          %1029 = vst [vmem:[%s453 + $0x28] sm:$0xff] %v1013
          %1030 = vst [vmem:[%s453 + $0x30] sm:$0xff] %v1014
          %1031 = vst [vmem:[%s453 + $0x38] sm:$0xff] %v1015
          %1032 = vst [vmem:[%s453 + $0x40] sm:$0xff] %v1016
          %1033 = vst [vmem:[%s453 + $0x48] sm:$0xff] %v1017
          %1034 = vst [vmem:[%s453 + $0x50] sm:$0xff] %v1018
          %1035 = vst [vmem:[%s453 + $0x58] sm:$0xff] %v1019
          %1036 = vst [vmem:[%s453 + $0x60] sm:$0xff] %v1020
          %1037 = vst [vmem:[%s453 + $0x68] sm:$0xff] %v1021
          %1038 = vst [vmem:[%s453 + $0x70] sm:$0xff] %v1022
          %1039 = vst [vmem:[%s453 + $0x78] sm:$0xff] %v1023
          %1040 = vadd.xlane.f32.xlu0 %v1008
          %v1041 = vpop.xlane.xlu0 %1040
          %1042 = vadd.xlane.f32.xlu0 %v1009
          %v1043 = vpop.xlane.xlu0 %1042
          %1044 = vadd.xlane.f32.xlu0 %v1010
          %v1045 = vpop.xlane.xlu0 %1044
          %1046 = vadd.xlane.f32.xlu0 %v1011
          %v1047 = vpop.xlane.xlu0 %1046
          %1048 = vadd.xlane.f32.xlu0 %v1012
          %v1049 = vpop.xlane.xlu0 %1048
          %1050 = vadd.xlane.f32.xlu0 %v1013
          %v1051 = vpop.xlane.xlu0 %1050
          %1052 = vadd.xlane.f32.xlu0 %v1014
          %v1053 = vpop.xlane.xlu0 %1052
          %1054 = vadd.xlane.f32.xlu0 %v1015
          %v1055 = vpop.xlane.xlu0 %1054
          %1056 = vadd.xlane.f32.xlu0 %v1016
          %v1057 = vpop.xlane.xlu0 %1056
          %1058 = vadd.xlane.f32.xlu0 %v1017
          %v1059 = vpop.xlane.xlu0 %1058
          %1060 = vadd.xlane.f32.xlu0 %v1018
          %v1061 = vpop.xlane.xlu0 %1060
          %1062 = vadd.xlane.f32.xlu0 %v1019
          %v1063 = vpop.xlane.xlu0 %1062
          %1064 = vadd.xlane.f32.xlu0 %v1020
          %v1065 = vpop.xlane.xlu0 %1064
          %1066 = vadd.xlane.f32.xlu0 %v1021
          %v1067 = vpop.xlane.xlu0 %1066
          %1068 = vadd.xlane.f32.xlu0 %v1022
          %v1069 = vpop.xlane.xlu0 %1068
          %1070 = vadd.xlane.f32.xlu0 %v1023
          %v1071 = vpop.xlane.xlu0 %1070
          %v1072 = vmax.f32 %v1041, 1e-12
          %v1073 = vmax.f32 %v1043, 1e-12
          %v1074 = vmax.f32 %v1045, 1e-12
          %v1075 = vmax.f32 %v1047, 1e-12
          %v1076 = vmax.f32 %v1049, 1e-12
          %v1077 = vmax.f32 %v1051, 1e-12
          %v1078 = vmax.f32 %v1053, 1e-12
          %v1079 = vmax.f32 %v1055, 1e-12
          %v1080 = vmax.f32 %v1057, 1e-12
          %v1081 = vmax.f32 %v1059, 1e-12
          %v1082 = vmax.f32 %v1061, 1e-12
          %v1083 = vmax.f32 %v1063, 1e-12
          %v1084 = vmax.f32 %v1065, 1e-12
          %v1085 = vmax.f32 %v1067, 1e-12
          %v1086 = vmax.f32 %v1069, 1e-12
          %v1087 = vmax.f32 %v1071, 1e-12
          %v1088 = vmin.f32 %v1072, 1e+12
          %v1089 = vmin.f32 %v1073, 1e+12
          %v1090 = vmin.f32 %v1074, 1e+12
          %v1091 = vmin.f32 %v1075, 1e+12
          %v1092 = vmin.f32 %v1076, 1e+12
          %v1093 = vmin.f32 %v1077, 1e+12
          %v1094 = vmin.f32 %v1078, 1e+12
          %v1095 = vmin.f32 %v1079, 1e+12
          %v1096 = vmin.f32 %v1080, 1e+12
          %v1097 = vmin.f32 %v1081, 1e+12
          %v1098 = vmin.f32 %v1082, 1e+12
          %v1099 = vmin.f32 %v1083, 1e+12
          %v1100 = vmin.f32 %v1084, 1e+12
          %v1101 = vmin.f32 %v1085, 1e+12
          %v1102 = vmin.f32 %v1086, 1e+12
          %v1103 = vmin.f32 %v1087, 1e+12
          %v1104 = vsel %vm551, %v1088, 0.0
          %v1105 = vsel %vm552, %v1089, 0.0
          %v1106 = vsel %vm553, %v1090, 0.0
          %v1107 = vsel %vm554, %v1091, 0.0
          %v1108 = vsel %vm555, %v1092, 0.0
          %v1109 = vsel %vm556, %v1093, 0.0
          %v1110 = vsel %vm557, %v1094, 0.0
          %v1111 = vsel %vm558, %v1095, 0.0
          %v1112 = vsel %vm559, %v1096, 0.0
          %v1113 = vsel %vm560, %v1097, 0.0
          %v1114 = vsel %vm561, %v1098, 0.0
          %v1115 = vsel %vm562, %v1099, 0.0
          %v1116 = vsel %vm563, %v1100, 0.0
          %v1117 = vsel %vm564, %v1101, 0.0
          %v1118 = vsel %vm565, %v1102, 0.0
          %v1119 = vsel %vm566, %v1103, 0.0
          %v1120 = vadd.f32 %v1104, 0.0
          %v1121 = vadd.f32 %v1105, 0.0
          %v1122 = vadd.f32 %v1106, 0.0
          %v1123 = vadd.f32 %v1107, 0.0
          %v1124 = vadd.f32 %v1108, 0.0
          %v1125 = vadd.f32 %v1109, 0.0
          %v1126 = vadd.f32 %v1110, 0.0
          %v1127 = vadd.f32 %v1111, 0.0
          %v1128 = vadd.f32 %v1112, 0.0
          %v1129 = vadd.f32 %v1113, 0.0
          %v1130 = vadd.f32 %v1114, 0.0
          %v1131 = vadd.f32 %v1115, 0.0
          %v1132 = vadd.f32 %v1116, 0.0
          %v1133 = vadd.f32 %v1117, 0.0
          %v1134 = vadd.f32 %v1118, 0.0
          %v1135 = vadd.f32 %v1119, 0.0
          %vm1136 = vcmask 7168
          %v1137 = vsel %vm1136, %v1120, 0.0
          %v1138 = vsel %vm1136, %v1121, 0.0
          %v1139 = vadd.f32 %v1137, %v1138
          %v1140 = vsel %vm1136, %v1122, 0.0
          %v1141 = vadd.f32 %v1139, %v1140
          %v1142 = vsel %vm1136, %v1123, 0.0
          %v1143 = vadd.f32 %v1141, %v1142
          %v1144 = vsel %vm1136, %v1124, 0.0
          %v1145 = vadd.f32 %v1143, %v1144
          %v1146 = vsel %vm1136, %v1125, 0.0
          %v1147 = vadd.f32 %v1145, %v1146
          %v1148 = vsel %vm1136, %v1126, 0.0
          %v1149 = vadd.f32 %v1147, %v1148
          %v1150 = vsel %vm1136, %v1127, 0.0
          %v1151 = vadd.f32 %v1149, %v1150
          %v1152 = vsel %vm1136, %v1128, 0.0
          %v1153 = vadd.f32 %v1151, %v1152
          %v1154 = vsel %vm1136, %v1129, 0.0
          %v1155 = vadd.f32 %v1153, %v1154
          %v1156 = vsel %vm1136, %v1130, 0.0
          %v1157 = vadd.f32 %v1155, %v1156
          %v1158 = vsel %vm1136, %v1131, 0.0
          %v1159 = vadd.f32 %v1157, %v1158
          %v1160 = vsel %vm1136, %v1132, 0.0
          %v1161 = vadd.f32 %v1159, %v1160
          %v1162 = vsel %vm1136, %v1133, 0.0
          %v1163 = vadd.f32 %v1161, %v1162
          %v1164 = vsel %vm1136, %v1134, 0.0
          %v1165 = vadd.f32 %v1163, %v1164
          %v1166 = vsel %vm1136, %v1135, 0.0
          %v1167 = vadd.f32 %v1165, %v1166
          %v1168 = vrot.slane %v1167, 4
          %v1169 = vadd.f32 %v1167, %v1168
          %v1170 = vrot.slane %v1169, 2
          %v1171 = vadd.f32 %v1169, %v1170
          %v1172 = vrot.slane %v1171, 1
          %v1173 = vadd.f32 %v1171, %v1172
          %vm1174 = vcmask 0
          %1175 = vst.msk [vmem:[#allocation2] sm:$0x1] %vm1174, %v1173
        $region56: #{tpu_custom_call.1} parent=51 // pred_fallthru
          _
        %v1176 = vld [vmem:[%s467] sm:$0xff]
        %v1177 = vld [vmem:[%s467 + $0x8] sm:$0xff]
        %v1178 = vld [vmem:[%s467 + $0x10] sm:$0xff]
        %v1179 = vld [vmem:[%s467 + $0x18] sm:$0xff]
        %v1180 = vld [vmem:[%s467 + $0x20] sm:$0xff]
        %v1181 = vld [vmem:[%s467 + $0x28] sm:$0xff]
        %v1182 = vld [vmem:[%s467 + $0x30] sm:$0xff]
        %v1183 = vld [vmem:[%s467 + $0x38] sm:$0xff]
        %v1184 = vld [vmem:[%s467 + $0x40] sm:$0xff]
        %v1185 = vld [vmem:[%s467 + $0x48] sm:$0xff]
        %v1186 = vld [vmem:[%s467 + $0x50] sm:$0xff]
        %v1187 = vld [vmem:[%s467 + $0x58] sm:$0xff]
        %v1188 = vld [vmem:[%s467 + $0x60] sm:$0xff]
        %v1189 = vld [vmem:[%s467 + $0x68] sm:$0xff]
        %v1190 = vld [vmem:[%s467 + $0x70] sm:$0xff]
        %v1191 = vld [vmem:[%s467 + $0x78] sm:$0xff]
        %vm1192 = vcmask 523264
        %v1194 = vsel %vm1192, %v501, 0
        %v1197 = vsel %vm1192, %v502, 0
        %v1200 = vsel %vm1192, %v503, 0
        %v1203 = vsel %vm1192, %v504, 0
        %v1206 = vsel %vm1192, %v505, 0
        %v1209 = vsel %vm1192, %v506, 0
        %v1212 = vsel %vm1192, %v507, 0
        %v1215 = vsel %vm1192, %v508, 0
        %v1218 = vsel %vm1192, %v509, 0
        %v1221 = vsel %vm1192, %v510, 0
        %v1224 = vsel %vm1192, %v511, 0
        %v1227 = vsel %vm1192, %v512, 0
        %v1230 = vsel %vm1192, %v513, 0
        %v1233 = vsel %vm1192, %v514, 0
        %v1236 = vsel %vm1192, %v515, 0
        %v1239 = vsel %vm1192, %v516, 0
        %v1242 = vsel %vm1192, %v1176, 0
        %v1245 = vsel %vm1192, %v1177, 0
        %v1248 = vsel %vm1192, %v1178, 0
        %v1251 = vsel %vm1192, %v1179, 0
        %v1254 = vsel %vm1192, %v1180, 0
        %v1257 = vsel %vm1192, %v1181, 0
        %v1260 = vsel %vm1192, %v1182, 0
        %v1263 = vsel %vm1192, %v1183, 0
        %v1266 = vsel %vm1192, %v1184, 0
        %v1269 = vsel %vm1192, %v1185, 0
        %v1272 = vsel %vm1192, %v1186, 0
        %v1275 = vsel %vm1192, %v1187, 0
        %v1278 = vsel %vm1192, %v1188, 0
        %v1281 = vsel %vm1192, %v1189, 0
        %v1284 = vsel %vm1192, %v1190, 0
        %v1287 = vsel %vm1192, %v1191, 0
        %1289 = vmatprep.subr.mxu0 0.0
        %1290 = vmatpush1.xpose.msra.mxu0 %v1287
        %1291 = vmatprep.subr.mxu0 0.0
        %1292 = vmatpush1.xpose.msra.mxu0 %v1284
        %1293 = vmatprep.subr.mxu0 0.0
        %1294 = vmatpush1.xpose.msra.mxu0 %v1281
        %1295 = vmatprep.subr.mxu0 0.0
        %1296 = vmatpush1.xpose.msra.mxu0 %v1278
        %1297 = vmatprep.subr.mxu0 0.0
        %1298 = vmatpush1.xpose.msra.mxu0 %v1275
        %1299 = vmatprep.subr.mxu0 0.0
        %1300 = vmatpush1.xpose.msra.mxu0 %v1272
        %1301 = vmatprep.subr.mxu0 0.0
        %1302 = vmatpush1.xpose.msra.mxu0 %v1269
        %1303 = vmatprep.subr.mxu0 0.0
        %1304 = vmatpush1.xpose.msra.mxu0 %v1266
        %1305 = vmatprep.subr.mxu0 0.0
        %1306 = vmatpush1.xpose.msra.mxu0 %v1263
        %1307 = vmatprep.subr.mxu0 0.0
        %1308 = vmatpush1.xpose.msra.mxu0 %v1260
        %1309 = vmatprep.subr.mxu0 0.0
        %1310 = vmatpush1.xpose.msra.mxu0 %v1257
        %1311 = vmatprep.subr.mxu0 0.0
        %1312 = vmatpush1.xpose.msra.mxu0 %v1254
        %1313 = vmatprep.subr.mxu0 0.0
        %1314 = vmatpush1.xpose.msra.mxu0 %v1251
        %1315 = vmatprep.subr.mxu0 0.0
        %1316 = vmatpush1.xpose.msra.mxu0 %v1248
        %1317 = vmatprep.subr.mxu0 0.0
        %1318 = vmatpush1.xpose.msra.mxu0 %v1245
        %1319 = vmatprep.subr.mxu0 0.0
        %1320 = vmatpush1.xpose.msra.mxu0 %v1242
        %1321 = vmatprep.subr.mxu0 0.0
        %1322 = vmatpush2.xpose.msra.mxu0 0.0
        %1323 = vmatprep.subr.mxu0 0.0
        %1324 = vmatpush2.xpose.msra.mxu0 0.0
        %1325 = vmatprep.subr.mxu0 0.0
        %1326 = vmatpush2.xpose.msra.mxu0 0.0
        %1327 = vmatprep.subr.mxu0 0.0
        %1328 = vmatpush2.xpose.msra.mxu0 0.0
        %1329 = vmatprep.subr.mxu0 0.0
        %1330 = vmatpush2.xpose.msra.mxu0 0.0
        %1331 = vmatprep.subr.mxu0 0.0
        %1332 = vmatpush2.xpose.msra.mxu0 0.0
        %1333 = vmatprep.subr.mxu0 0.0
        %1334 = vmatpush2.xpose.msra.mxu0 0.0
        %1335 = vmatprep.subr.mxu0 0.0
        %1336 = vmatpush2.xpose.msra.mxu0 0.0
        %1337 = vmatprep.subr.mxu0 0.0
        %1338 = vmatpush2.xpose.msra.mxu0 0.0
        %1339 = vmatprep.subr.mxu0 0.0
        %1340 = vmatpush2.xpose.msra.mxu0 0.0
        %1341 = vmatprep.subr.mxu0 0.0
        %1342 = vmatpush2.xpose.msra.mxu0 0.0
        %1343 = vmatprep.subr.mxu0 0.0
        %1344 = vmatpush2.xpose.msra.mxu0 0.0
        %1345 = vmatprep.subr.mxu0 0.0
        %1346 = vmatpush2.xpose.msra.mxu0 0.0
        %1347 = vmatprep.subr.mxu0 0.0
        %1348 = vmatpush2.xpose.msra.mxu0 0.0
        %1349 = vmatprep.subr.mxu0 0.0
        %1350 = vmatpush2.xpose.msra.mxu0 0.0
        %1351 = vmatprep.subr.mxu0 0.0
        %1352 = vmatpush2.xpose.msra.mxu0 0.0
        %1353 = vmatprep.mubr.f32.mxu0 0.0
        %1354 = vmatmul.mubr.f32.gmra.mxu0 %v1194
        %v1355 = vpop.f32.mrf.mxu0
        %v1356 = vadd.f32 0.0, %v1355
        %v1357 = vpop.f32.mrf.mxu0
        %1358 = vmatprep.mubr.f32.mxu0 0.0
        %1359 = vmatmul.mubr.f32.gmra.mxu0 %v1197
        %v1360 = vpop.f32.mrf.mxu0
        %v1361 = vadd.f32 0.0, %v1360
        %v1362 = vpop.f32.mrf.mxu0
        %1363 = vmatprep.mubr.f32.mxu0 0.0
        %1364 = vmatmul.mubr.f32.gmra.mxu0 %v1200
        %v1365 = vpop.f32.mrf.mxu0
        %v1366 = vadd.f32 0.0, %v1365
        %v1367 = vpop.f32.mrf.mxu0
        %1368 = vmatprep.mubr.f32.mxu0 0.0
        %1369 = vmatmul.mubr.f32.gmra.mxu0 %v1203
        %v1370 = vpop.f32.mrf.mxu0
        %v1371 = vadd.f32 0.0, %v1370
        %v1372 = vpop.f32.mrf.mxu0
        %1373 = vmatprep.mubr.f32.mxu0 0.0
        %1374 = vmatmul.mubr.f32.gmra.mxu0 %v1206
        %v1375 = vpop.f32.mrf.mxu0
        %v1376 = vadd.f32 0.0, %v1375
        %v1377 = vpop.f32.mrf.mxu0
        %1378 = vmatprep.mubr.f32.mxu0 0.0
        %1379 = vmatmul.mubr.f32.gmra.mxu0 %v1209
        %v1380 = vpop.f32.mrf.mxu0
        %v1381 = vadd.f32 0.0, %v1380
        %v1382 = vpop.f32.mrf.mxu0
        %1383 = vmatprep.mubr.f32.mxu0 0.0
        %1384 = vmatmul.mubr.f32.gmra.mxu0 %v1212
        %v1385 = vpop.f32.mrf.mxu0
        %v1386 = vadd.f32 0.0, %v1385
        %v1387 = vpop.f32.mrf.mxu0
        %1388 = vmatprep.mubr.f32.mxu0 0.0
        %1389 = vmatmul.mubr.f32.gmra.mxu0 %v1215
        %v1390 = vpop.f32.mrf.mxu0
        %v1391 = vadd.f32 0.0, %v1390
        %v1392 = vpop.f32.mrf.mxu0
        %1393 = vmatprep.mubr.f32.mxu0 0.0
        %1394 = vmatmul.mubr.f32.gmra.mxu0 %v1218
        %v1395 = vpop.f32.mrf.mxu0
        %v1396 = vadd.f32 0.0, %v1395
        %v1397 = vpop.f32.mrf.mxu0
        %1398 = vmatprep.mubr.f32.mxu0 0.0
        %1399 = vmatmul.mubr.f32.gmra.mxu0 %v1221
        %v1400 = vpop.f32.mrf.mxu0
        %v1401 = vadd.f32 0.0, %v1400
        %v1402 = vpop.f32.mrf.mxu0
        %1403 = vmatprep.mubr.f32.mxu0 0.0
        %1404 = vmatmul.mubr.f32.gmra.mxu0 %v1224
        %v1405 = vpop.f32.mrf.mxu0
        %v1406 = vadd.f32 0.0, %v1405
        %v1407 = vpop.f32.mrf.mxu0
        %1408 = vmatprep.mubr.f32.mxu0 0.0
        %1409 = vmatmul.mubr.f32.gmra.mxu0 %v1227
        %v1410 = vpop.f32.mrf.mxu0
        %v1411 = vadd.f32 0.0, %v1410
        %v1412 = vpop.f32.mrf.mxu0
        %1413 = vmatprep.mubr.f32.mxu0 0.0
        %1414 = vmatmul.mubr.f32.gmra.mxu0 %v1230
        %v1415 = vpop.f32.mrf.mxu0
        %v1416 = vadd.f32 0.0, %v1415
        %v1417 = vpop.f32.mrf.mxu0
        %1418 = vmatprep.mubr.f32.mxu0 0.0
        %1419 = vmatmul.mubr.f32.gmra.mxu0 %v1233
        %v1420 = vpop.f32.mrf.mxu0
        %v1421 = vadd.f32 0.0, %v1420
        %v1422 = vpop.f32.mrf.mxu0
        %1423 = vmatprep.mubr.f32.mxu0 0.0
        %1424 = vmatmul.mubr.f32.gmra.mxu0 %v1236
        %v1425 = vpop.f32.mrf.mxu0
        %v1426 = vadd.f32 0.0, %v1425
        %v1427 = vpop.f32.mrf.mxu0
        %1428 = vmatprep.mubr.f32.mxu0 0.0
        %1429 = vmatmul.mubr.f32.gmra.mxu0 %v1239
        %v1430 = vpop.f32.mrf.mxu0
        %v1431 = vadd.f32 0.0, %v1430
        %v1432 = vpop.f32.mrf.mxu0
        %1433 = vdwg.mxu0
        %1435 = vset.pattern.permute.xlu0 0
        %1436 = vperm.xlu0 %1435, %v534
        %v1437 = vpop.permute.xlu0 %1436
        %1440 = vset.pattern.permute.xlu0 0
        %1441 = vperm.xlu0 %1440, %v535
        %v1442 = vpop.permute.xlu0 %1441
        %1445 = vset.pattern.permute.xlu0 0
        %1446 = vperm.xlu0 %1445, %v536
        %v1447 = vpop.permute.xlu0 %1446
        %1450 = vset.pattern.permute.xlu0 0
        %1451 = vperm.xlu0 %1450, %v537
        %v1452 = vpop.permute.xlu0 %1451
        %1455 = vset.pattern.permute.xlu0 0
        %1456 = vperm.xlu0 %1455, %v538
        %v1457 = vpop.permute.xlu0 %1456
        %1460 = vset.pattern.permute.xlu0 0
        %1461 = vperm.xlu0 %1460, %v539
        %v1462 = vpop.permute.xlu0 %1461
        %1465 = vset.pattern.permute.xlu0 0
        %1466 = vperm.xlu0 %1465, %v540
        %v1467 = vpop.permute.xlu0 %1466
        %1470 = vset.pattern.permute.xlu0 0
        %1471 = vperm.xlu0 %1470, %v541
        %v1472 = vpop.permute.xlu0 %1471
        %1475 = vset.pattern.permute.xlu0 0
        %1476 = vperm.xlu0 %1475, %v542
        %v1477 = vpop.permute.xlu0 %1476
        %1480 = vset.pattern.permute.xlu0 0
        %1481 = vperm.xlu0 %1480, %v543
        %v1482 = vpop.permute.xlu0 %1481
        %1485 = vset.pattern.permute.xlu0 0
        %1486 = vperm.xlu0 %1485, %v544
        %v1487 = vpop.permute.xlu0 %1486
        %1490 = vset.pattern.permute.xlu0 0
        %1491 = vperm.xlu0 %1490, %v545
        %v1492 = vpop.permute.xlu0 %1491
        %1495 = vset.pattern.permute.xlu0 0
        %1496 = vperm.xlu0 %1495, %v546
        %v1497 = vpop.permute.xlu0 %1496
        %1500 = vset.pattern.permute.xlu0 0
        %1501 = vperm.xlu0 %1500, %v547
        %v1502 = vpop.permute.xlu0 %1501
        %1505 = vset.pattern.permute.xlu0 0
        %1506 = vperm.xlu0 %1505, %v548
        %v1507 = vpop.permute.xlu0 %1506
        %1510 = vset.pattern.permute.xlu0 0
        %1511 = vperm.xlu0 %1510, %v549
        %v1512 = vpop.permute.xlu0 %1511
        %v1515 = vlaneseq
        %v1516 = vshrl.u32 %v1515, 7
        %v1517 = vsub.s32 0, %v1516
        %v1518 = vrot.slane %v550, %v1517
        %v1520 = vadd.f32 %v1437, %v1518
        %v1521 = vadd.f32 %v1442, %v1518
        %v1522 = vadd.f32 %v1447, %v1518
        %v1523 = vadd.f32 %v1452, %v1518
        %v1524 = vadd.f32 %v1457, %v1518
        %v1525 = vadd.f32 %v1462, %v1518
        %v1526 = vadd.f32 %v1467, %v1518
        %v1527 = vadd.f32 %v1472, %v1518
        %v1528 = vadd.f32 %v1477, %v1518
        %v1529 = vadd.f32 %v1482, %v1518
        %v1530 = vadd.f32 %v1487, %v1518
        %v1531 = vadd.f32 %v1492, %v1518
        %v1532 = vadd.f32 %v1497, %v1518
        %v1533 = vadd.f32 %v1502, %v1518
        %v1534 = vadd.f32 %v1507, %v1518
        %v1535 = vadd.f32 %v1512, %v1518
        %v1536 = vmul.f32 %v1356, 2.0
        %v1537 = vmul.f32 %v1361, 2.0
        %v1538 = vmul.f32 %v1366, 2.0
        %v1539 = vmul.f32 %v1371, 2.0
        %v1540 = vmul.f32 %v1376, 2.0
        %v1541 = vmul.f32 %v1381, 2.0
        %v1542 = vmul.f32 %v1386, 2.0
        %v1543 = vmul.f32 %v1391, 2.0
        %v1544 = vmul.f32 %v1396, 2.0
        %v1545 = vmul.f32 %v1401, 2.0
        %v1546 = vmul.f32 %v1406, 2.0
        %v1547 = vmul.f32 %v1411, 2.0
        %v1548 = vmul.f32 %v1416, 2.0
        %v1549 = vmul.f32 %v1421, 2.0
        %v1550 = vmul.f32 %v1426, 2.0
        %v1551 = vmul.f32 %v1431, 2.0
        %v1552 = vsub.f32 %v1520, %v1536
        %v1553 = vsub.f32 %v1521, %v1537
        %v1554 = vsub.f32 %v1522, %v1538
        %v1555 = vsub.f32 %v1523, %v1539
        %v1556 = vsub.f32 %v1524, %v1540
        %v1557 = vsub.f32 %v1525, %v1541
        %v1558 = vsub.f32 %v1526, %v1542
        %v1559 = vsub.f32 %v1527, %v1543
        %v1560 = vsub.f32 %v1528, %v1544
        %v1561 = vsub.f32 %v1529, %v1545
        %v1562 = vsub.f32 %v1530, %v1546
        %v1563 = vsub.f32 %v1531, %v1547
        %v1564 = vsub.f32 %v1532, %v1548
        %v1565 = vsub.f32 %v1533, %v1549
        %v1566 = vsub.f32 %v1534, %v1550
        %v1567 = vsub.f32 %v1535, %v1551
        %1568 = vset.pattern.permute.xlu0 0
        %1569 = vperm.xlu0 %1568, %v517
        %v1570 = vpop.permute.xlu0 %1569
        %1571 = vset.pattern.permute.xlu0 0
        %1572 = vperm.xlu0 %1571, %v518
        %v1573 = vpop.permute.xlu0 %1572
        %1574 = vset.pattern.permute.xlu0 0
        %1575 = vperm.xlu0 %1574, %v519
        %v1576 = vpop.permute.xlu0 %1575
        %1577 = vset.pattern.permute.xlu0 0
        %1578 = vperm.xlu0 %1577, %v520
        %v1579 = vpop.permute.xlu0 %1578
        %1580 = vset.pattern.permute.xlu0 0
        %1581 = vperm.xlu0 %1580, %v521
        %v1582 = vpop.permute.xlu0 %1581
        %1583 = vset.pattern.permute.xlu0 0
        %1584 = vperm.xlu0 %1583, %v522
        %v1585 = vpop.permute.xlu0 %1584
        %1586 = vset.pattern.permute.xlu0 0
        %1587 = vperm.xlu0 %1586, %v523
        %v1588 = vpop.permute.xlu0 %1587
        %1589 = vset.pattern.permute.xlu0 0
        %1590 = vperm.xlu0 %1589, %v524
        %v1591 = vpop.permute.xlu0 %1590
        %1592 = vset.pattern.permute.xlu0 0
        %1593 = vperm.xlu0 %1592, %v525
        %v1594 = vpop.permute.xlu0 %1593
        %1595 = vset.pattern.permute.xlu0 0
        %1596 = vperm.xlu0 %1595, %v526
        %v1597 = vpop.permute.xlu0 %1596
        %1598 = vset.pattern.permute.xlu0 0
        %1599 = vperm.xlu0 %1598, %v527
        %v1600 = vpop.permute.xlu0 %1599
        %1601 = vset.pattern.permute.xlu0 0
        %1602 = vperm.xlu0 %1601, %v528
        %v1603 = vpop.permute.xlu0 %1602
        %1604 = vset.pattern.permute.xlu0 0
        %1605 = vperm.xlu0 %1604, %v529
        %v1606 = vpop.permute.xlu0 %1605
        %1607 = vset.pattern.permute.xlu0 0
        %1608 = vperm.xlu0 %1607, %v530
        %v1609 = vpop.permute.xlu0 %1608
        %1610 = vset.pattern.permute.xlu0 0
        %1611 = vperm.xlu0 %1610, %v531
        %v1612 = vpop.permute.xlu0 %1611
        %1613 = vset.pattern.permute.xlu0 0
        %1614 = vperm.xlu0 %1613, %v532
        %v1615 = vpop.permute.xlu0 %1614
        %v1616 = vlaneseq
        %v1617 = vshrl.u32 %v1616, 7
        %v1618 = vsub.s32 0, %v1617
        %v1619 = vrot.slane %v533, %v1618
        %vm1620 = vcmp.ne.s32.totalorder %v1570, %v1619
        %vm1621 = vcmp.ne.s32.totalorder %v1573, %v1619
        %vm1622 = vcmp.ne.s32.totalorder %v1576, %v1619
        %vm1623 = vcmp.ne.s32.totalorder %v1579, %v1619
        %vm1624 = vcmp.ne.s32.totalorder %v1582, %v1619
        %vm1625 = vcmp.ne.s32.totalorder %v1585, %v1619
        %vm1626 = vcmp.ne.s32.totalorder %v1588, %v1619
        %vm1627 = vcmp.ne.s32.totalorder %v1591, %v1619
        %vm1628 = vcmp.ne.s32.totalorder %v1594, %v1619
        %vm1629 = vcmp.ne.s32.totalorder %v1597, %v1619
        %vm1630 = vcmp.ne.s32.totalorder %v1600, %v1619
        %vm1631 = vcmp.ne.s32.totalorder %v1603, %v1619
        %vm1632 = vcmp.ne.s32.totalorder %v1606, %v1619
        %vm1633 = vcmp.ne.s32.totalorder %v1609, %v1619
        %vm1634 = vcmp.ne.s32.totalorder %v1612, %v1619
        %vm1635 = vcmp.ne.s32.totalorder %v1615, %v1619
        %v1636 = vsel %vm1620, 1, 0
        %v1637 = vsel %vm1621, 1, 0
        %v1638 = vsel %vm1622, 1, 0
        %v1639 = vsel %vm1623, 1, 0
        %v1640 = vsel %vm1624, 1, 0
        %v1641 = vsel %vm1625, 1, 0
        %v1642 = vsel %vm1626, 1, 0
        %v1643 = vsel %vm1627, 1, 0
        %v1644 = vsel %vm1628, 1, 0
        %v1645 = vsel %vm1629, 1, 0
        %v1646 = vsel %vm1630, 1, 0
        %v1647 = vsel %vm1631, 1, 0
        %v1648 = vsel %vm1632, 1, 0
        %v1649 = vsel %vm1633, 1, 0
        %v1650 = vsel %vm1634, 1, 0
        %v1651 = vsel %vm1635, 1, 0
        %v1652 = vcvt.s32.f32 %v1636
        %v1653 = vcvt.s32.f32 %v1637
        %v1654 = vcvt.s32.f32 %v1638
        %v1655 = vcvt.s32.f32 %v1639
        %v1656 = vcvt.s32.f32 %v1640
        %v1657 = vcvt.s32.f32 %v1641
        %v1658 = vcvt.s32.f32 %v1642
        %v1659 = vcvt.s32.f32 %v1643
        %v1660 = vcvt.s32.f32 %v1644
        %v1661 = vcvt.s32.f32 %v1645
        %v1662 = vcvt.s32.f32 %v1646
        %v1663 = vcvt.s32.f32 %v1647
        %v1664 = vcvt.s32.f32 %v1648
        %v1665 = vcvt.s32.f32 %v1649
        %v1666 = vcvt.s32.f32 %v1650
        %v1667 = vcvt.s32.f32 %v1651
        %v1668 = vmul.f32 %v1552, %v1652
        %v1669 = vmul.f32 %v1553, %v1653
        %v1670 = vmul.f32 %v1554, %v1654
        %v1671 = vmul.f32 %v1555, %v1655
        %v1672 = vmul.f32 %v1556, %v1656
        %v1673 = vmul.f32 %v1557, %v1657
        %v1674 = vmul.f32 %v1558, %v1658
        %v1675 = vmul.f32 %v1559, %v1659
        %v1676 = vmul.f32 %v1560, %v1660
        %v1677 = vmul.f32 %v1561, %v1661
        %v1678 = vmul.f32 %v1562, %v1662
        %v1679 = vmul.f32 %v1563, %v1663
        %v1680 = vmul.f32 %v1564, %v1664
        %v1681 = vmul.f32 %v1565, %v1665
        %v1682 = vmul.f32 %v1566, %v1666
        %v1683 = vmul.f32 %v1567, %v1667
        %v1684 = vadd.f32 %v1668, 1.0
        %v1685 = vadd.f32 %v1669, 1.0
        %v1686 = vadd.f32 %v1670, 1.0
        %v1687 = vadd.f32 %v1671, 1.0
        %v1688 = vadd.f32 %v1672, 1.0
        %v1689 = vadd.f32 %v1673, 1.0
        %v1690 = vadd.f32 %v1674, 1.0
        %v1691 = vadd.f32 %v1675, 1.0
        %v1692 = vadd.f32 %v1676, 1.0
        %v1693 = vadd.f32 %v1677, 1.0
        %v1694 = vadd.f32 %v1678, 1.0
        %v1695 = vadd.f32 %v1679, 1.0
        %v1696 = vadd.f32 %v1680, 1.0
        %v1697 = vadd.f32 %v1681, 1.0
        %v1698 = vadd.f32 %v1682, 1.0
        %v1699 = vadd.f32 %v1683, 1.0
        %v1700 = vlog2.pop %v1684
        %v1701 = vmul.f32 %v1700, 0.6931472
        %v1702 = vlog2.pop %v1685
        %v1703 = vmul.f32 %v1702, 0.6931472
        %v1704 = vlog2.pop %v1686
        %v1705 = vmul.f32 %v1704, 0.6931472
        %v1706 = vlog2.pop %v1687
        %v1707 = vmul.f32 %v1706, 0.6931472
        %v1708 = vlog2.pop %v1688
        %v1709 = vmul.f32 %v1708, 0.6931472
        %v1710 = vlog2.pop %v1689
        %v1711 = vmul.f32 %v1710, 0.6931472
        %v1712 = vlog2.pop %v1690
        %v1713 = vmul.f32 %v1712, 0.6931472
        %v1714 = vlog2.pop %v1691
        %v1715 = vmul.f32 %v1714, 0.6931472
        %v1716 = vlog2.pop %v1692
        %v1717 = vmul.f32 %v1716, 0.6931472
        %v1718 = vlog2.pop %v1693
        %v1719 = vmul.f32 %v1718, 0.6931472
        %v1720 = vlog2.pop %v1694
        %v1721 = vmul.f32 %v1720, 0.6931472
        %v1722 = vlog2.pop %v1695
        %v1723 = vmul.f32 %v1722, 0.6931472
        %v1724 = vlog2.pop %v1696
        %v1725 = vmul.f32 %v1724, 0.6931472
        %v1726 = vlog2.pop %v1697
        %v1727 = vmul.f32 %v1726, 0.6931472
        %v1728 = vlog2.pop %v1698
        %v1729 = vmul.f32 %v1728, 0.6931472
        %v1730 = vlog2.pop %v1699
        %v1731 = vmul.f32 %v1730, 0.6931472
        %v1732 = vmax.f32 %v1701, 1e-12
        %v1733 = vmax.f32 %v1703, 1e-12
        %v1734 = vmax.f32 %v1705, 1e-12
        %v1735 = vmax.f32 %v1707, 1e-12
        %v1736 = vmax.f32 %v1709, 1e-12
        %v1737 = vmax.f32 %v1711, 1e-12
        %v1738 = vmax.f32 %v1713, 1e-12
        %v1739 = vmax.f32 %v1715, 1e-12
        %v1740 = vmax.f32 %v1717, 1e-12
        %v1741 = vmax.f32 %v1719, 1e-12
        %v1742 = vmax.f32 %v1721, 1e-12
        %v1743 = vmax.f32 %v1723, 1e-12
        %v1744 = vmax.f32 %v1725, 1e-12
        %v1745 = vmax.f32 %v1727, 1e-12
        %v1746 = vmax.f32 %v1729, 1e-12
        %v1747 = vmax.f32 %v1731, 1e-12
        %v1748 = vmin.f32 %v1732, 1e+12
        %v1749 = vmin.f32 %v1733, 1e+12
        %v1750 = vmin.f32 %v1734, 1e+12
        %v1751 = vmin.f32 %v1735, 1e+12
        %v1752 = vmin.f32 %v1736, 1e+12
        %v1753 = vmin.f32 %v1737, 1e+12
        %v1754 = vmin.f32 %v1738, 1e+12
        %v1755 = vmin.f32 %v1739, 1e+12
        %v1756 = vmin.f32 %v1740, 1e+12
        %v1757 = vmin.f32 %v1741, 1e+12
        %v1758 = vmin.f32 %v1742, 1e+12
        %v1759 = vmin.f32 %v1743, 1e+12
        %v1760 = vmin.f32 %v1744, 1e+12
        %v1761 = vmin.f32 %v1745, 1e+12
        %v1762 = vmin.f32 %v1746, 1e+12
        %v1763 = vmin.f32 %v1747, 1e+12
        %v1764 = vsel %vm551, 1, 0
        %v1765 = vsel %vm552, 1, 0
        %v1766 = vsel %vm553, 1, 0
        %v1767 = vsel %vm554, 1, 0
        %v1768 = vsel %vm555, 1, 0
        %v1769 = vsel %vm556, 1, 0
        %v1770 = vsel %vm557, 1, 0
        %v1771 = vsel %vm558, 1, 0
        %v1772 = vsel %vm559, 1, 0
        %v1773 = vsel %vm560, 1, 0
        %v1774 = vsel %vm561, 1, 0
        %v1775 = vsel %vm562, 1, 0
        %v1776 = vsel %vm563, 1, 0
        %v1777 = vsel %vm564, 1, 0
        %v1778 = vsel %vm565, 1, 0
        %v1779 = vsel %vm566, 1, 0
        %1780 = vset.pattern.permute.xlu0 0
        %1781 = vperm.xlu0 %1780, %v1764
        %v1782 = vpop.permute.xlu0 %1781
        %1783 = vset.pattern.permute.xlu0 0
        %1784 = vperm.xlu0 %1783, %v1765
        %v1785 = vpop.permute.xlu0 %1784
        %1786 = vset.pattern.permute.xlu0 0
        %1787 = vperm.xlu0 %1786, %v1766
        %v1788 = vpop.permute.xlu0 %1787
        %1789 = vset.pattern.permute.xlu0 0
        %1790 = vperm.xlu0 %1789, %v1767
        %v1791 = vpop.permute.xlu0 %1790
        %1792 = vset.pattern.permute.xlu0 0
        %1793 = vperm.xlu0 %1792, %v1768
        %v1794 = vpop.permute.xlu0 %1793
        %1795 = vset.pattern.permute.xlu0 0
        %1796 = vperm.xlu0 %1795, %v1769
        %v1797 = vpop.permute.xlu0 %1796
        %1798 = vset.pattern.permute.xlu0 0
        %1799 = vperm.xlu0 %1798, %v1770
        %v1800 = vpop.permute.xlu0 %1799
        %1801 = vset.pattern.permute.xlu0 0
        %1802 = vperm.xlu0 %1801, %v1771
        %v1803 = vpop.permute.xlu0 %1802
        %1804 = vset.pattern.permute.xlu0 0
        %1805 = vperm.xlu0 %1804, %v1772
        %v1806 = vpop.permute.xlu0 %1805
        %1807 = vset.pattern.permute.xlu0 0
        %1808 = vperm.xlu0 %1807, %v1773
        %v1809 = vpop.permute.xlu0 %1808
        %1810 = vset.pattern.permute.xlu0 0
        %1811 = vperm.xlu0 %1810, %v1774
        %v1812 = vpop.permute.xlu0 %1811
        %1813 = vset.pattern.permute.xlu0 0
        %1814 = vperm.xlu0 %1813, %v1775
        %v1815 = vpop.permute.xlu0 %1814
        %1816 = vset.pattern.permute.xlu0 0
        %1817 = vperm.xlu0 %1816, %v1776
        %v1818 = vpop.permute.xlu0 %1817
        %1819 = vset.pattern.permute.xlu0 0
        %1820 = vperm.xlu0 %1819, %v1777
        %v1821 = vpop.permute.xlu0 %1820
        %1822 = vset.pattern.permute.xlu0 0
        %1823 = vperm.xlu0 %1822, %v1778
        %v1824 = vpop.permute.xlu0 %1823
        %1825 = vset.pattern.permute.xlu0 0
        %1826 = vperm.xlu0 %1825, %v1779
        %v1827 = vpop.permute.xlu0 %1826
        %vm1828 = vcmp.eq.s32.totalorder %v1782, 1
        %vm1829 = vcmp.eq.s32.totalorder %v1785, 1
        %vm1830 = vcmp.eq.s32.totalorder %v1788, 1
        %vm1831 = vcmp.eq.s32.totalorder %v1791, 1
        %vm1832 = vcmp.eq.s32.totalorder %v1794, 1
        %vm1833 = vcmp.eq.s32.totalorder %v1797, 1
        %vm1834 = vcmp.eq.s32.totalorder %v1800, 1
        %vm1835 = vcmp.eq.s32.totalorder %v1803, 1
        %vm1836 = vcmp.eq.s32.totalorder %v1806, 1
        %vm1837 = vcmp.eq.s32.totalorder %v1809, 1
        %vm1838 = vcmp.eq.s32.totalorder %v1812, 1
        %vm1839 = vcmp.eq.s32.totalorder %v1815, 1
        %vm1840 = vcmp.eq.s32.totalorder %v1818, 1
        %vm1841 = vcmp.eq.s32.totalorder %v1821, 1
        %vm1842 = vcmp.eq.s32.totalorder %v1824, 1
        %vm1843 = vcmp.eq.s32.totalorder %v1827, 1
        %v1844 = vsel %vm567, 1, 0
        %v1845 = vlaneseq
        %v1846 = vshrl.u32 %v1845, 7
        %v1847 = vsub.s32 0, %v1846
        %v1848 = vrot.slane %v1844, %v1847
        %vm1849 = vcmp.eq.s32.totalorder %v1848, 1
        %vm1850 = vmand %vm1828, %vm1849
        %vm1851 = vmand %vm1829, %vm1849
        %vm1852 = vmand %vm1830, %vm1849
        %vm1853 = vmand %vm1831, %vm1849
        %vm1854 = vmand %vm1832, %vm1849
        %vm1855 = vmand %vm1833, %vm1849
        %vm1856 = vmand %vm1834, %vm1849
        %vm1857 = vmand %vm1835, %vm1849
        %vm1858 = vmand %vm1836, %vm1849
        %vm1859 = vmand %vm1837, %vm1849
        %vm1860 = vmand %vm1838, %vm1849
        %vm1861 = vmand %vm1839, %vm1849
        %vm1862 = vmand %vm1840, %vm1849
        %vm1863 = vmand %vm1841, %vm1849
        %vm1864 = vmand %vm1842, %vm1849
        %vm1865 = vmand %vm1843, %vm1849
        %v1866 = vsel %vm1850, %v1748, 0.0
        %v1867 = vsel %vm1851, %v1749, 0.0
        %v1868 = vsel %vm1852, %v1750, 0.0
        %v1869 = vsel %vm1853, %v1751, 0.0
        %v1870 = vsel %vm1854, %v1752, 0.0
        %v1871 = vsel %vm1855, %v1753, 0.0
        %v1872 = vsel %vm1856, %v1754, 0.0
        %v1873 = vsel %vm1857, %v1755, 0.0
        %v1874 = vsel %vm1858, %v1756, 0.0
        %v1875 = vsel %vm1859, %v1757, 0.0
        %v1876 = vsel %vm1860, %v1758, 0.0
        %v1877 = vsel %vm1861, %v1759, 0.0
        %v1878 = vsel %vm1862, %v1760, 0.0
        %v1879 = vsel %vm1863, %v1761, 0.0
        %v1880 = vsel %vm1864, %v1762, 0.0
        %v1881 = vsel %vm1865, %v1763, 0.0
        %p1882 = scmp.lt.s32.totalorder %s500, %s499
        %s1883 = scalar_select %p1882, 2.0, 1.0
        %v1884 = vld [vmem:[#allocation3] sm:$0x1]
        %v1885 = vadd.f32 %v1866, %v1867
        %v1886 = vadd.f32 %v1885, %v1868
        %v1887 = vadd.f32 %v1886, %v1869
        %v1888 = vadd.f32 %v1887, %v1870
        %v1889 = vadd.f32 %v1888, %v1871
        %v1890 = vadd.f32 %v1889, %v1872
        %v1891 = vadd.f32 %v1890, %v1873
        %v1892 = vadd.f32 %v1891, %v1874
        %v1893 = vadd.f32 %v1892, %v1875
        %v1894 = vadd.f32 %v1893, %v1876
        %v1895 = vadd.f32 %v1894, %v1877
        %v1896 = vadd.f32 %v1895, %v1878
        %v1897 = vadd.f32 %v1896, %v1879
        %v1898 = vadd.f32 %v1897, %v1880
        %v1899 = vadd.f32 %v1898, %v1881
        %v1900 = vrot.slane %v1899, 4
        %v1901 = vadd.f32 %v1899, %v1900
        %v1902 = vrot.slane %v1901, 2
        %v1903 = vadd.f32 %v1901, %v1902
        %v1904 = vrot.slane %v1903, 1
        %v1905 = vadd.f32 %v1903, %v1904
        %v1906 = vstv %s1883
        %v1907 = vmul.f32 %v1906, %v1905
        %v1908 = vadd.f32 %v1884, %v1907
        %1909 = vst [vmem:[#allocation3] sm:$0x1] %v1908
        %p1910 = scmp.eq.s32.totalorder %s500, %s499
        // Predicated region
        $region57: #{tpu_custom_call.1} parent=51 // pred_check
          %p1911 = pneg %p1910
        $region58: #{tpu_custom_call.1} parent=51 // pred_check_branch
          %1913 = sbr.rel (%p1911) target = $region60
        $region59: #{tpu_custom_call.1} parent=51 // pred_region
          %v1914 = vld [vmem:[#allocation3] sm:$0x1]
          %vm1915 = vcmask 1040384
          %v1916 = vsel %vm1915, %v1914, 0.0
          %1917 = vadd.xlane.f32.xlu0 %v1916
          %v1918 = vpop.xlane.xlu0 %1917
          %v1919 = vadd.f32 %v1918, 0.0
          %v1920 = vld [vmem:[#allocation2] sm:$0x1]
          %v1921 = vlaneseq
          %v1922 = vshrl.u32 %v1921, 7
          %v1923 = vlaneseq
          %v1924 = vand.u32 %v1923, 127
          %vm1925 = vcmp.eq.s32.totalorder %v1922, 0
          %vm1926 = vcmp.eq.s32.totalorder %v1924, 0
          %vm1927 = vmand %vm1925, %vm1926
          %v1929 = vlaneseq
          %v1930 = vshrl.u32 %v1929, 7
          %v1931 = vsub.s32 0, %v1930
          %v1932 = vrot.slane %v1920, %v1931
          %1933 = vset.pattern.permute.xlu0 0
          %1934 = vperm.xlu0 %1933, %v1932
          %v1935 = vpop.permute.xlu0 %1934
          %v1937 = vsel %vm1927, %v1935, 0.0
          %vm1938 = vcmp.eq.s32.totalorder %v1924, 1
          %vm1939 = vmand %vm1925, %vm1938
          %v1940 = vlaneseq
          %v1941 = vshrl.u32 %v1940, 7
          %v1942 = vsub.s32 0, %v1941
          %v1943 = vrot.slane %v1919, %v1942
          %v1944 = vsel %vm1939, %v1943, 0.0
          %v1945 = vadd.f32 %v1937, %v1944
          %1946 = vst [vmem:[%s446] sm:$0xff] %v1945
        $region60: #{tpu_custom_call.1} parent=51 // pred_fallthru
          _
        %s1947 = sand.u32 %s259, 1
        %s1948 = scalar_lea.sflag [#allocation8], %s1947
        %s1949 = sand.u32 %s259, 1
        %s1950 = smul.addr %s1949, 8
        %s1951 = scalar_lea.vmem [#allocation7], %s1950
        %s1952 = sand.u32 %s287, 1
        %s1953 = scalar_lea.sflag [#allocation10], %s1952
        %s1954 = sand.u32 %s287, 1
        %s1955 = smul.addr %s1954, 128
        %s1956 = scalar_lea.vmem [#allocation9], %s1955
        // Predicated region
        $region61: #{tpu_custom_call.1} parent=51 // pred_check
          %p1957 = pneg %p269
        $region62: #{tpu_custom_call.1} parent=51 // pred_check_branch
          %1959 = sbr.rel (%p1957) target = $region64
        $region63: #{tpu_custom_call.1} parent=51 // pred_region
          %s1960 = sld [smem:[#allocation5 + %s39]]
          %s1962 = ssub.s32 128, 128
          %1963 = vsyncadd %s1948, %s1962
          %s1964 = smul.addr %s1960, 128
          %s1965 = scalar_lea.hbm %s10, %s1964
          %s1967 = sshll.u32 %s1951, 4
          %s1968 = int_to_ptr.vmem [resolvable:$true] %s1967
          %1970 = dma.vmem_to_hbm [thread:$0]  %s1968, 128, %s1965, %s1948
        $region64: #{tpu_custom_call.1} parent=51 // pred_fallthru
          _
        // Predicated region
        $region65: #{tpu_custom_call.1} parent=51 // pred_check
          %p1971 = pneg %p297
        $region66: #{tpu_custom_call.1} parent=51 // pred_check_branch
          %1973 = sbr.rel (%p1971) target = $region68
        $region67: #{tpu_custom_call.1} parent=51 // pred_region
          %s1974 = sld [smem:[#allocation5 + %s39]]
          %s1975 = smul.u32 16, %s1974
          %s1977 = ssub.s32 2048, 2048
          %1978 = vsyncadd %s1953, %s1977
          %s1979 = smul.addr %s1975, 128
          %s1980 = scalar_lea.hbm %s11, %s1979
          %s1981 = sshll.u32 %s1956, 4
          %s1982 = int_to_ptr.vmem [resolvable:$true] %s1981
          %1987 = dma.vmem_to_hbm [thread:$0]  %s1982, 2048, %s1980, %s1953, 128, 128, 8
        $region68: #{tpu_custom_call.1} parent=51 // pred_fallthru
          _
      $region52: #{tpu_custom_call.1} parent=5 // pred_fallthru
        _
      %p1988 = scmp.le.s32.totalorder 2, %s34
      // Predicated region
      $region69: #{tpu_custom_call.1} parent=5 // pred_check
        %p1989 = pneg %p1988
      $region70: #{tpu_custom_call.1} parent=5 // pred_check_branch
        %1991 = sbr.rel (%p1989) target = $region72
      $region71: #{tpu_custom_call.1} parent=5 // pred_region
        %s1992 = ssub.s32 %s34, 2
        // Predicated region
        $region73: #{tpu_custom_call.1} parent=71 // pred_check
          %p1993 = pneg %p275
        $region74: #{tpu_custom_call.1} parent=71 // pred_check_branch
          %1995 = sbr.rel (%p1993) target = $region76
        $region75: #{tpu_custom_call.1} parent=71 // pred_region
          %s1996 = sand.u32 %s260, 1
          %s1997 = scalar_lea.sflag [#allocation8], %s1996
          %s1998 = sand.u32 %s260, 1
          %s1999 = smul.addr %s1998, 8
          %s2000 = scalar_lea.vmem [#allocation7], %s1999
          %2001 = dma.done %s1997, 128
        $region76: #{tpu_custom_call.1} parent=71 // pred_fallthru
          _
        // Predicated region
        $region77: #{tpu_custom_call.1} parent=71 // pred_check
          %p2002 = pneg %p303
        $region78: #{tpu_custom_call.1} parent=71 // pred_check_branch
          %2004 = sbr.rel (%p2002) target = $region80
        $region79: #{tpu_custom_call.1} parent=71 // pred_region
          %s2005 = sand.u32 %s288, 1
          %s2006 = scalar_lea.sflag [#allocation10], %s2005
          %s2007 = sand.u32 %s288, 1
          %s2008 = smul.addr %s2007, 128
          %s2009 = scalar_lea.vmem [#allocation9], %s2008
          %2010 = dma.done %s2006, 2048
        $region80: #{tpu_custom_call.1} parent=71 // pred_fallthru
          _
      $region72: #{tpu_custom_call.1} parent=5 // pred_fallthru
        _
    $region6: #{tpu_custom_call.1} parent=1 // loop_footer
      %s38 = sadd.s32 1, %s34
    $region7: #{tpu_custom_call.1} parent=1 // loop_footer_branch
      %33 = sbr.rel target = $region3
    $region8: #{tpu_custom_call.1} parent=1 // loop_exit
      _
    %2011 = vsyncpa [#allocation8], 1
    %s2012 = scalar_lea.sflag [#allocation8], 1
    %2013 = vsyncpa %s2012, 1
    %2014 = vsyncpa [#allocation10], 1
    %s2015 = scalar_lea.sflag [#allocation10], 1
    %2016 = vsyncpa %s2015, 1

</llo_original>
